<compile_context>
chip_gen: v5e
topology: v5e:2x2
jax: 0.10.0
libtpu: 0.0.40
codegen_flags: <defaults>
</compile_context>

<pallas_src>
import jax
import jax.numpy as jnp
import numpy as np
from jax.experimental import pallas as pl
from jax.experimental.pallas import tpu as pltpu


def _centered_dft_matrices(n, inverse):
    """Real/imag parts of M with M @ v == fftshift(FFT_ortho(ifftshift(v)))."""
    eye = np.eye(n, dtype=np.complex64)
    shifted = np.fft.ifftshift(eye, axes=0)
    f = (np.fft.ifft if inverse else np.fft.fft)(shifted, axis=0, norm="ortho")
    m = np.fft.fftshift(f, axes=0)
    return np.real(m).astype(np.float32), np.imag(m).astype(np.float32)


def _fused_kernel(x_ref, invw_ref, acs_ref,            # (2,H,W), (H,W), (2,H,W)
                  fhr_ref, fhi_ref, fhs_ref,           # (H,H) height fwd DFT (re, im, re+im)
                  fwr_ref, fwi_ref, fws_ref,           # (W,W) width inv DFT^T (re, im, re+im)
                  sk_ref, ksp_ref, cmg_ref,            # (2,H,W) each
                  img_ref, rss_ref):                   # (H,W), (H,W) partial SOS
    j = pl.program_id(1)

    # Partial-RSS output block has an index map constant in j -> resident
    # across the per-core coil loop; init on the first coil of each core.
    @pl.when(j == 0)
    def _init():
        rss_ref[...] = jnp.zeros_like(rss_ref)

    # semi_kspace_recons = net_output * (1/weighting) + acs   (per-coil planes)
    inv_w = invw_ref[...]
    sk_re = x_ref[0] * inv_w + acs_ref[0]
    sk_im = x_ref[1] * inv_w + acs_ref[1]
    sk_ref[0] = sk_re
    sk_ref[1] = sk_im
    sk_sum = sk_re + sk_im            # shared Karatsuba term (one VPU add)

    # kspace_recons = centered ortho FFT along H  ->  M_H @ sk
    # 3-matmul Gauss form: re = T1 - T2, im = T3 - T1 - T2.
    t1 = jnp.dot(fhr_ref[...], sk_re, preferred_element_type=jnp.float32)
    t2 = jnp.dot(fhi_ref[...], sk_im, preferred_element_type=jnp.float32)
    t3 = jnp.dot(fhs_ref[...], sk_sum, preferred_element_type=jnp.float32)
    ksp_ref[0] = t1 - t2
    ksp_ref[1] = t3 - t1 - t2

    # cmg_recons = centered ortho IFFT along W    ->  sk @ M_W^T  (3-matmul)
    u1 = jnp.dot(sk_re, fwr_ref[...], preferred_element_type=jnp.float32)
    u2 = jnp.dot(sk_im, fwi_ref[...], preferred_element_type=jnp.float32)
    u3 = jnp.dot(sk_sum, fws_ref[...], preferred_element_type=jnp.float32)
    cmg_re = u1 - u2
    cmg_im = u3 - u1 - u2
    cmg_ref[0] = cmg_re
    cmg_ref[1] = cmg_im

    # img_recons = |cmg|; partial RSS accumulates sum_coil img^2 (== |cmg|^2).
    mag_sq = cmg_re * cmg_re + cmg_im * cmg_im
    img_ref[...] = jnp.sqrt(mag_sq)
    rss_ref[...] += mag_sq


def post_process_w_semi_kcc(semi_kspace_outputs, targets, extra_params, *,
                            challenge="multicoil", weighted=True,
                            residual_acs=True):
    """JAX/Pallas port of PostProcessWSemiKCC.forward."""
    if challenge not in ("singlecoil", "multicoil"):
        raise ValueError('Challenge should either be "singlecoil" or "multicoil"')
    if semi_kspace_outputs.shape[0] > 1:
        raise NotImplementedError("Only one at a time for now.")

    n, c2, h, w = semi_kspace_outputs.shape
    assert c2 % 2 == 0, "NCHW input must have an even channel count (re/im pairs)."
    c = c2 // 2
    assert h % 2 == 0 and w % 2 == 0, \
        "Not impossible but not expected to have sides with odd lengths."

    sk_targets = targets["semi_kspace_targets"]
    assert tuple(sk_targets.shape) == (n, c, h, w, 2), \
        "Reconstruction and target sizes are different."

    # nchw_to_kspace minus its final permute: planar (coil, re/im, H, W).
    # Free reshape of the NCHW tensor; keeps W on the lane axis.
    x = jnp.asarray(semi_kspace_outputs, jnp.float32).reshape(c, 2, h, w)

    if weighted:
        # TODO(synk): assumes the usual coil/complex-independent semi-kspace
        # weighting (broadcastable to (1, 1, H, W, 1)).
        weighting = jnp.asarray(extra_params["weightings"], jnp.float32)
        weighting = jnp.broadcast_to(weighting, (1, 1, h, w, 1))[0, 0, :, :, 0]
        inv_w = 1.0 / weighting          # hoisted out of the per-coil loop
    else:
        inv_w = jnp.ones((h, w), jnp.float32)

    if residual_acs:
        acs = jnp.asarray(targets["semi_kspace_acss"], jnp.float32)
        acs = jnp.moveaxis(acs.reshape(c, h, w, 2), -1, 1)   # planar (C,2,H,W)
    else:
        acs = jnp.zeros((c, 2, h, w), jnp.float32)

    sk_scale = jnp.asarray(extra_params.get("sk_scales", 1.0), jnp.float32)

    # Centered, ortho-normalized DFT matrices (shifts folded in) + Gauss sums.
    fhr_m, fhi_m = _centered_dft_matrices(h, inverse=False)     # FFT along H
    fwr_m, fwi_m = _centered_dft_matrices(w, inverse=True)      # IFFT along W
    fwr_m = np.ascontiguousarray(fwr_m.T)                       # right-multiply form
    fwi_m = np.ascontiguousarray(fwi_m.T)
    fhr, fhi = jnp.asarray(fhr_m), jnp.asarray(fhi_m)
    fhs = jnp.asarray(fhr_m + fhi_m)
    fwr, fwi = jnp.asarray(fwr_m), jnp.asarray(fwi_m)
    fws = jnp.asarray(fwr_m + fwi_m)

    # --- Coil split across TensorCores (v7x megacore); pad coils if odd. ---
    n_split = 2 if c >= 2 else 1
    cpc = -(-c // n_split)              # coils per core
    c_pad = n_split * cpc
    if c_pad != c:
        pad = c_pad - c
        x = jnp.concatenate([x, jnp.zeros((pad, 2, h, w), jnp.float32)], axis=0)
        acs = jnp.concatenate([acs, jnp.zeros((pad, 2, h, w), jnp.float32)], axis=0)

    # --- BlockSpecs: lane-dense planar blocks; constants single-buffered. ---
    once = pl.Buffered(1)               # grid-invariant -> 2nd buffer is waste
    coil_spec = pl.BlockSpec((None, 2, h, w), lambda p, j: (p * cpc + j, 0, 0, 0))
    img_spec = pl.BlockSpec((None, h, w), lambda p, j: (p * cpc + j, 0, 0))
    invw_spec = pl.BlockSpec((h, w), lambda p, j: (0, 0), pipeline_mode=once)
    hmat_spec = pl.BlockSpec((h, h), lambda p, j: (0, 0), pipeline_mode=once)
    wmat_spec = pl.BlockSpec((w, w), lambda p, j: (0, 0), pipeline_mode=once)
    rss_spec = pl.BlockSpec((None, h, w), lambda p, j: (p, 0, 0))

    out_shape = (
        jax.ShapeDtypeStruct((c_pad, 2, h, w), jnp.float32),   # semi_kspace (planar)
        jax.ShapeDtypeStruct((c_pad, 2, h, w), jnp.float32),   # kspace      (planar)
        jax.ShapeDtypeStruct((c_pad, 2, h, w), jnp.float32),   # cmg         (planar)
        jax.ShapeDtypeStruct((c_pad, h, w), jnp.float32),      # img
        jax.ShapeDtypeStruct((n_split, h, w), jnp.float32),    # partial sum(img^2)
    )

    flops = int(c_pad * (6 * h * w * (h + w) + 16 * h * w))
    bytes_accessed = int(4 * (2 * c_pad * 2 * h * w          # x + acs in
                              + 3 * c_pad * 2 * h * w        # sk/ksp/cmg out
                              + c_pad * h * w                # img out
                              + (1 + n_split) * h * w        # inv_w + rss partials
                              + 3 * (h * h + w * w)))        # DFT matrices
    cost = pl.CostEstimate(flops=flops,
                           transcendentals=int(c_pad * h * w),
                           bytes_accessed=bytes_accessed)

    sk_p, ksp_p, cmg_p, img_p, rss_partial = pl.pallas_call(
        _fused_kernel,
        out_shape=out_shape,
        grid=(n_split, cpc),
        in_specs=[coil_spec, invw_spec, coil_spec,
                  hmat_spec, hmat_spec, hmat_spec,
                  wmat_spec, wmat_spec, wmat_spec],
        out_specs=(coil_spec, coil_spec, coil_spec, img_spec, rss_spec),
        compiler_params=pltpu.CompilerParams(
            # leading axis parallel (v7x cores), coil axis is the RSS reduction
            dimension_semantics=("parallel", "arbitrary"),
            # fits v7x's 64 MiB physical VMEM; ample for v5e/v6e (128 MiB)
            vmem_limit_bytes=48 * 1024 * 1024),
        cost_estimate=cost,
    )(x, inv_w, acs, fhr, fhi, fhs, fwr, fwi, fws)

    # Wrapper-side layout plumbing back to the PyTorch (..., H, W, 2) format.
    def planar_to_complex_last(t):     # (C,2,H,W) -> (1,C,H,W,2)
        return jnp.moveaxis(t, 1, -1)[None]

    recons = {
        "semi_kspace_recons": planar_to_complex_last(sk_p[:c]),
        "kspace_recons": planar_to_complex_last(ksp_p[:c]),
        "cmg_recons": planar_to_complex_last(cmg_p[:c]),
        "img_recons": img_p[:c][None],
    }
    if challenge == "multicoil":
        # Finalize across per-core partials (cheap (n_split,H,W) reduce),
        # scale applied exactly once here.   batch==1 -> squeeze() == (H, W)
        recons["rss_recons"] = jnp.sqrt(jnp.sum(rss_partial, axis=0)) * sk_scale
    return recons


# ----------------------------- numpy reference -----------------------------

def _np_fft1(data, direction, inverse):
    z = data[..., 0] + 1j * data[..., 1]
    axis = -2 if direction == "height" else -1
    z = np.fft.ifftshift(z, axes=axis)
    z = (np.fft.ifft if inverse else np.fft.fft)(z, axis=axis, norm="ortho")
    z = np.fft.fftshift(z, axes=axis)
    return np.stack([z.real, z.imag], axis=-1)


def _reference(outputs, targets, extra_params, challenge):
    x = np.asarray(outputs, np.float64)
    n, c2, h, w = x.shape
    c = c2 // 2
    sk = x.reshape(n, c, 2, h, w).transpose(0, 1, 3, 4, 2)     # nchw_to_kspace
    sk = sk / np.asarray(extra_params["weightings"], np.float64)
    sk = sk + np.asarray(targets["semi_kspace_acss"], np.float64)
    ksp = _np_fft1(sk, "height", inverse=False)
    cmg = _np_fft1(sk, "width", inverse=True)
    img = np.sqrt((cmg ** 2).sum(-1))
    out = {"semi_kspace_recons": sk, "kspace_recons": ksp,
           "cmg_recons": cmg, "img_recons": img}
    if challenge == "multicoil":
        rss = np.sqrt((img ** 2).sum(axis=1)).squeeze()
        out["rss_recons"] = rss * float(extra_params["sk_scales"])
    return out


if __name__ == "__main__":
    key = jax.random.PRNGKey(0)
    k1, k2, k3, k4 = jax.random.split(key, 4)

    # Small shapes consistent with the module: batch=1 (required), 4 coils
    # (8 NCHW channels), H=W=16 (even, as the module asserts).
    B, COILS, H, W = 1, 4, 16, 16
    outputs = jax.random.normal(k1, (B, 2 * COILS, H, W), dtype=jnp.float32)
    sk_targets = jax.random.normal(k2, (B, COILS, H, W, 2), dtype=jnp.float32)
    acs = jax.random.normal(k3, (B, COILS, H, W, 2), dtype=jnp.float32)
    weighting = 0.5 + jax.random.uniform(k4, (1, 1, H, W, 1), dtype=jnp.float32)

    targets = {"semi_kspace_targets": sk_targets, "semi_kspace_acss": acs}
    extra_params = {"weightings": weighting, "sk_scales": jnp.float32(2.0)}

    recons = post_process_w_semi_kcc(outputs, targets, extra_params,
                                     challenge="multicoil",
                                     weighted=True, residual_acs=True)
    jax.block_until_ready(recons)

    ref = _reference(np.asarray(outputs),
                     {k: np.asarray(v) for k, v in targets.items()},
                     {"weightings": np.asarray(weighting),
                      "sk_scales": float(extra_params["sk_scales"])},
                     "multicoil")

    for name in ("semi_kspace_recons", "kspace_recons", "cmg_recons",
                 "img_recons", "rss_recons"):
        got = np.asarray(recons[name])
        want = np.asarray(ref[name])
        assert got.shape == want.shape, (name, got.shape, want.shape)
        assert np.allclose(got, want, atol=1e-4, rtol=1e-4), name

    print("KERNEL_OK")
</pallas_src>

<mosaic_0001>
module attributes {stable_mosaic.version = 11 : i64} {
  func.func @_fused_kernel(%arg0: i32, %arg1: i32, %arg2: memref<1x2x16x16xf32, #tpu.memory_space<vmem>>, %arg3: memref<16x16xf32, #tpu.memory_space<vmem>>, %arg4: memref<1x2x16x16xf32, #tpu.memory_space<vmem>>, %arg5: memref<16x16xf32, #tpu.memory_space<vmem>>, %arg6: memref<16x16xf32, #tpu.memory_space<vmem>>, %arg7: memref<16x16xf32, #tpu.memory_space<vmem>>, %arg8: memref<16x16xf32, #tpu.memory_space<vmem>>, %arg9: memref<16x16xf32, #tpu.memory_space<vmem>>, %arg10: memref<16x16xf32, #tpu.memory_space<vmem>>, %arg11: memref<1x2x16x16xf32, #tpu.memory_space<vmem>>, %arg12: memref<1x2x16x16xf32, #tpu.memory_space<vmem>>, %arg13: memref<1x2x16x16xf32, #tpu.memory_space<vmem>>, %arg14: memref<1x16x16xf32, #tpu.memory_space<vmem>>, %arg15: memref<1x16x16xf32, #tpu.memory_space<vmem>>) attributes {dimension_semantics = [#tpu.dimension_semantics<parallel>, #tpu.dimension_semantics<arbitrary>], iteration_bounds = array<i64: 2, 2>, scalar_prefetch = 0 : i64, scratch_operands = 0 : i64, tpu.core_type = #tpu.core_type<tc>, window_params = [{transform_indices = @transform_0, window_bounds = array<i64: 1, 2, 16, 16>}, {pipeline_mode = #tpu.pipeline_mode<synchronous>, transform_indices = @transform_1, window_bounds = array<i64: 16, 16>}, {transform_indices = @transform_2, window_bounds = array<i64: 1, 2, 16, 16>}, {pipeline_mode = #tpu.pipeline_mode<synchronous>, transform_indices = @transform_3, window_bounds = array<i64: 16, 16>}, {pipeline_mode = #tpu.pipeline_mode<synchronous>, transform_indices = @transform_4, window_bounds = array<i64: 16, 16>}, {pipeline_mode = #tpu.pipeline_mode<synchronous>, transform_indices = @transform_5, window_bounds = array<i64: 16, 16>}, {pipeline_mode = #tpu.pipeline_mode<synchronous>, transform_indices = @transform_6, window_bounds = array<i64: 16, 16>}, {pipeline_mode = #tpu.pipeline_mode<synchronous>, transform_indices = @transform_7, window_bounds = array<i64: 16, 16>}, {pipeline_mode = #tpu.pipeline_mode<synchronous>, transform_indices = @transform_8, window_bounds = array<i64: 16, 16>}, {transform_indices = @transform_9, window_bounds = array<i64: 1, 2, 16, 16>}, {transform_indices = @transform_10, window_bounds = array<i64: 1, 2, 16, 16>}, {transform_indices = @transform_11, window_bounds = array<i64: 1, 2, 16, 16>}, {transform_indices = @transform_12, window_bounds = array<i64: 1, 16, 16>}, {transform_indices = @transform_13, window_bounds = array<i64: 1, 16, 16>}]} {
    %c0_i32 = arith.constant 0 : i32
    %0 = arith.cmpi eq, %arg1, %c0_i32 : i32
    %1 = arith.extui %0 : i1 to i32
    %c0_i32_0 = arith.constant 0 : i32
    %2 = arith.cmpi ne, %1, %c0_i32_0 : i32
    scf.if %2 {
      %cst_67 = arith.constant 0.000000e+00 : f32
      %66 = vector.broadcast %cst_67 : f32 to vector<16x16xf32>
      %c0_68 = arith.constant 0 : index
      %c0_69 = arith.constant 0 : index
      %c0_70 = arith.constant 0 : index
      %67 = vector.load %arg15[%c0_68, %c0_69, %c0_70] : memref<1x16x16xf32, #tpu.memory_space<vmem>>, vector<1x16x16xf32>
      %68 = vector.shape_cast %67 : vector<1x16x16xf32> to vector<16x16xf32>
      %69 = vector.shape_cast %66 : vector<16x16xf32> to vector<1x16x16xf32>
      tpu.vector_store %arg15[%c0_68, %c0_69, %c0_70], %69 {strides = array<i32>} : memref<1x16x16xf32, #tpu.memory_space<vmem>>, vector<1x16x16xf32>,
    } else {
    }
    %c0 = arith.constant 0 : index
    %c0_1 = arith.constant 0 : index
    %3 = vector.load %arg3[%c0, %c0_1] : memref<16x16xf32, #tpu.memory_space<vmem>>, vector<16x16xf32>
    %c0_2 = arith.constant 0 : index
    %c0_3 = arith.constant 0 : index
    %c0_4 = arith.constant 0 : index
    %c0_5 = arith.constant 0 : index
    %4 = vector.load %arg2[%c0_2, %c0_3, %c0_4, %c0_5] : memref<1x2x16x16xf32, #tpu.memory_space<vmem>>, vector<1x1x16x16xf32>
    %5 = vector.shape_cast %4 : vector<1x1x16x16xf32> to vector<16x16xf32>
    %6 = arith.mulf %5, %3 : vector<16x16xf32>
    %c0_6 = arith.constant 0 : index
    %c0_7 = arith.constant 0 : index
    %c0_8 = arith.constant 0 : index
    %c0_9 = arith.constant 0 : index
    %7 = vector.load %arg4[%c0_6, %c0_7, %c0_8, %c0_9] : memref<1x2x16x16xf32, #tpu.memory_space<vmem>>, vector<1x1x16x16xf32>
    %8 = vector.shape_cast %7 : vector<1x1x16x16xf32> to vector<16x16xf32>
    %9 = arith.addf %6, %8 : vector<16x16xf32>
    %c0_10 = arith.constant 0 : index
    %c1 = arith.constant 1 : index
    %c0_11 = arith.constant 0 : index
    %c0_12 = arith.constant 0 : index
    %10 = vector.load %arg2[%c0_10, %c1, %c0_11, %c0_12] : memref<1x2x16x16xf32, #tpu.memory_space<vmem>>, vector<1x1x16x16xf32>
    %11 = vector.shape_cast %10 : vector<1x1x16x16xf32> to vector<16x16xf32>
    %12 = arith.mulf %11, %3 : vector<16x16xf32>
    %c0_13 = arith.constant 0 : index
    %c1_14 = arith.constant 1 : index
    %c0_15 = arith.constant 0 : index
    %c0_16 = arith.constant 0 : index
    %13 = vector.load %arg4[%c0_13, %c1_14, %c0_15, %c0_16] : memref<1x2x16x16xf32, #tpu.memory_space<vmem>>, vector<1x1x16x16xf32>
    %14 = vector.shape_cast %13 : vector<1x1x16x16xf32> to vector<16x16xf32>
    %15 = arith.addf %12, %14 : vector<16x16xf32>
    %c0_17 = arith.constant 0 : index
    %c0_18 = arith.constant 0 : index
    %c0_19 = arith.constant 0 : index
    %c0_20 = arith.constant 0 : index
    %16 = vector.load %arg11[%c0_17, %c0_18, %c0_19, %c0_20] : memref<1x2x16x16xf32, #tpu.memory_space<vmem>>, vector<1x1x16x16xf32>
    %17 = vector.shape_cast %16 : vector<1x1x16x16xf32> to vector<16x16xf32>
    %18 = vector.shape_cast %9 : vector<16x16xf32> to vector<1x1x16x16xf32>
    tpu.vector_store %arg11[%c0_17, %c0_18, %c0_19, %c0_20], %18 {strides = array<i32>} : memref<1x2x16x16xf32, #tpu.memory_space<vmem>>, vector<1x1x16x16xf32>,
    %c0_21 = arith.constant 0 : index
    %c1_22 = arith.constant 1 : index
    %c0_23 = arith.constant 0 : index
    %c0_24 = arith.constant 0 : index
    %19 = vector.load %arg11[%c0_21, %c1_22, %c0_23, %c0_24] : memref<1x2x16x16xf32, #tpu.memory_space<vmem>>, vector<1x1x16x16xf32>
    %20 = vector.shape_cast %19 : vector<1x1x16x16xf32> to vector<16x16xf32>
    %21 = vector.shape_cast %15 : vector<16x16xf32> to vector<1x1x16x16xf32>
    tpu.vector_store %arg11[%c0_21, %c1_22, %c0_23, %c0_24], %21 {strides = array<i32>} : memref<1x2x16x16xf32, #tpu.memory_space<vmem>>, vector<1x1x16x16xf32>,
    %22 = arith.addf %9, %15 : vector<16x16xf32>
    %c0_25 = arith.constant 0 : index
    %c0_26 = arith.constant 0 : index
    %23 = vector.load %arg5[%c0_25, %c0_26] : memref<16x16xf32, #tpu.memory_space<vmem>>, vector<16x16xf32>
    %cst = arith.constant dense<0.000000e+00> : vector<16x16xf32>
    %24 = tpu.matmul %23, %9, %cst {dimension_numbers = #tpu.dot_dimension_numbers<[1], [0], [0], [1], [0, 0, 1, 1], [], []>} : vector<16x16xf32>, vector<16x16xf32>, vector<16x16xf32> -> vector<16x16xf32>
    %c0_27 = arith.constant 0 : index
    %c0_28 = arith.constant 0 : index
    %25 = vector.load %arg6[%c0_27, %c0_28] : memref<16x16xf32, #tpu.memory_space<vmem>>, vector<16x16xf32>
    %cst_29 = arith.constant dense<0.000000e+00> : vector<16x16xf32>
    %26 = tpu.matmul %25, %15, %cst_29 {dimension_numbers = #tpu.dot_dimension_numbers<[1], [0], [0], [1], [0, 0, 1, 1], [], []>} : vector<16x16xf32>, vector<16x16xf32>, vector<16x16xf32> -> vector<16x16xf32>
    %c0_30 = arith.constant 0 : index
    %c0_31 = arith.constant 0 : index
    %27 = vector.load %arg7[%c0_30, %c0_31] : memref<16x16xf32, #tpu.memory_space<vmem>>, vector<16x16xf32>
    %cst_32 = arith.constant dense<0.000000e+00> : vector<16x16xf32>
    %28 = tpu.matmul %27, %22, %cst_32 {dimension_numbers = #tpu.dot_dimension_numbers<[1], [0], [0], [1], [0, 0, 1, 1], [], []>} : vector<16x16xf32>, vector<16x16xf32>, vector<16x16xf32> -> vector<16x16xf32>
    %29 = arith.subf %24, %26 : vector<16x16xf32>
    %c0_33 = arith.constant 0 : index
    %c0_34 = arith.constant 0 : index
    %c0_35 = arith.constant 0 : index
    %c0_36 = arith.constant 0 : index
    %30 = vector.load %arg12[%c0_33, %c0_34, %c0_35, %c0_36] : memref<1x2x16x16xf32, #tpu.memory_space<vmem>>, vector<1x1x16x16xf32>
    %31 = vector.shape_cast %30 : vector<1x1x16x16xf32> to vector<16x16xf32>
    %32 = vector.shape_cast %29 : vector<16x16xf32> to vector<1x1x16x16xf32>
    tpu.vector_store %arg12[%c0_33, %c0_34, %c0_35, %c0_36], %32 {strides = array<i32>} : memref<1x2x16x16xf32, #tpu.memory_space<vmem>>, vector<1x1x16x16xf32>,
    %33 = arith.subf %28, %24 : vector<16x16xf32>
    %34 = arith.subf %33, %26 : vector<16x16xf32>
    %c0_37 = arith.constant 0 : index
    %c1_38 = arith.constant 1 : index
    %c0_39 = arith.constant 0 : index
    %c0_40 = arith.constant 0 : index
    %35 = vector.load %arg12[%c0_37, %c1_38, %c0_39, %c0_40] : memref<1x2x16x16xf32, #tpu.memory_space<vmem>>, vector<1x1x16x16xf32>
    %36 = vector.shape_cast %35 : vector<1x1x16x16xf32> to vector<16x16xf32>
    %37 = vector.shape_cast %34 : vector<16x16xf32> to vector<1x1x16x16xf32>
    tpu.vector_store %arg12[%c0_37, %c1_38, %c0_39, %c0_40], %37 {strides = array<i32>} : memref<1x2x16x16xf32, #tpu.memory_space<vmem>>, vector<1x1x16x16xf32>,
    %c0_41 = arith.constant 0 : index
    %c0_42 = arith.constant 0 : index
    %38 = vector.load %arg8[%c0_41, %c0_42] : memref<16x16xf32, #tpu.memory_space<vmem>>, vector<16x16xf32>
    %cst_43 = arith.constant dense<0.000000e+00> : vector<16x16xf32>
    %39 = tpu.matmul %9, %38, %cst_43 {dimension_numbers = #tpu.dot_dimension_numbers<[1], [0], [0], [1], [0, 0, 1, 1], [], []>} : vector<16x16xf32>, vector<16x16xf32>, vector<16x16xf32> -> vector<16x16xf32>
    %c0_44 = arith.constant 0 : index
    %c0_45 = arith.constant 0 : index
    %40 = vector.load %arg9[%c0_44, %c0_45] : memref<16x16xf32, #tpu.memory_space<vmem>>, vector<16x16xf32>
    %cst_46 = arith.constant dense<0.000000e+00> : vector<16x16xf32>
    %41 = tpu.matmul %15, %40, %cst_46 {dimension_numbers = #tpu.dot_dimension_numbers<[1], [0], [0], [1], [0, 0, 1, 1], [], []>} : vector<16x16xf32>, vector<16x16xf32>, vector<16x16xf32> -> vector<16x16xf32>
    %c0_47 = arith.constant 0 : index
    %c0_48 = arith.constant 0 : index
    %42 = vector.load %arg10[%c0_47, %c0_48] : memref<16x16xf32, #tpu.memory_space<vmem>>, vector<16x16xf32>
    %cst_49 = arith.constant dense<0.000000e+00> : vector<16x16xf32>
    %43 = tpu.matmul %22, %42, %cst_49 {dimension_numbers = #tpu.dot_dimension_numbers<[1], [0], [0], [1], [0, 0, 1, 1], [], []>} : vector<16x16xf32>, vector<16x16xf32>, vector<16x16xf32> -> vector<16x16xf32>
    %44 = arith.subf %39, %41 : vector<16x16xf32>
    %45 = arith.subf %43, %39 : vector<16x16xf32>
    %46 = arith.subf %45, %41 : vector<16x16xf32>
    %c0_50 = arith.constant 0 : index
    %c0_51 = arith.constant 0 : index
    %c0_52 = arith.constant 0 : index
    %c0_53 = arith.constant 0 : index
    %47 = vector.load %arg13[%c0_50, %c0_51, %c0_52, %c0_53] : memref<1x2x16x16xf32, #tpu.memory_space<vmem>>, vector<1x1x16x16xf32>
    %48 = vector.shape_cast %47 : vector<1x1x16x16xf32> to vector<16x16xf32>
    %49 = vector.shape_cast %44 : vector<16x16xf32> to vector<1x1x16x16xf32>
    tpu.vector_store %arg13[%c0_50, %c0_51, %c0_52, %c0_53], %49 {strides = array<i32>} : memref<1x2x16x16xf32, #tpu.memory_space<vmem>>, vector<1x1x16x16xf32>,
    %c0_54 = arith.constant 0 : index
    %c1_55 = arith.constant 1 : index
    %c0_56 = arith.constant 0 : index
    %c0_57 = arith.constant 0 : index
    %50 = vector.load %arg13[%c0_54, %c1_55, %c0_56, %c0_57] : memref<1x2x16x16xf32, #tpu.memory_space<vmem>>, vector<1x1x16x16xf32>
    %51 = vector.shape_cast %50 : vector<1x1x16x16xf32> to vector<16x16xf32>
    %52 = vector.shape_cast %46 : vector<16x16xf32> to vector<1x1x16x16xf32>
    tpu.vector_store %arg13[%c0_54, %c1_55, %c0_56, %c0_57], %52 {strides = array<i32>} : memref<1x2x16x16xf32, #tpu.memory_space<vmem>>, vector<1x1x16x16xf32>,
    %53 = arith.mulf %44, %44 : vector<16x16xf32>
    %54 = arith.mulf %46, %46 : vector<16x16xf32>
    %55 = arith.addf %53, %54 : vector<16x16xf32>
    %56 = math.sqrt %55 : vector<16x16xf32>
    %c0_58 = arith.constant 0 : index
    %c0_59 = arith.constant 0 : index
    %c0_60 = arith.constant 0 : index
    %57 = vector.load %arg14[%c0_58, %c0_59, %c0_60] : memref<1x16x16xf32, #tpu.memory_space<vmem>>, vector<1x16x16xf32>
    %58 = vector.shape_cast %57 : vector<1x16x16xf32> to vector<16x16xf32>
    %59 = vector.shape_cast %56 : vector<16x16xf32> to vector<1x16x16xf32>
    tpu.vector_store %arg14[%c0_58, %c0_59, %c0_60], %59 {strides = array<i32>} : memref<1x16x16xf32, #tpu.memory_space<vmem>>, vector<1x16x16xf32>,
    %c0_61 = arith.constant 0 : index
    %c0_62 = arith.constant 0 : index
    %c0_63 = arith.constant 0 : index
    %60 = vector.load %arg15[%c0_61, %c0_62, %c0_63] : memref<1x16x16xf32, #tpu.memory_space<vmem>>, vector<1x16x16xf32>
    %61 = vector.shape_cast %60 : vector<1x16x16xf32> to vector<16x16xf32>
    %62 = arith.addf %61, %55 : vector<16x16xf32>
    %c0_64 = arith.constant 0 : index
    %c0_65 = arith.constant 0 : index
    %c0_66 = arith.constant 0 : index
    %63 = vector.load %arg15[%c0_64, %c0_65, %c0_66] : memref<1x16x16xf32, #tpu.memory_space<vmem>>, vector<1x16x16xf32>
    %64 = vector.shape_cast %63 : vector<1x16x16xf32> to vector<16x16xf32>
    %65 = vector.shape_cast %62 : vector<16x16xf32> to vector<1x16x16xf32>
    tpu.vector_store %arg15[%c0_64, %c0_65, %c0_66], %65 {strides = array<i32>} : memref<1x16x16xf32, #tpu.memory_space<vmem>>, vector<1x16x16xf32>,
    return
  }
  func.func @transform_0(%arg0: i32, %arg1: i32) -> (i32, i32, i32, i32) {
    %c2_i32 = arith.constant 2 : i32
    %0 = arith.muli %arg0, %c2_i32 : i32
    %1 = arith.addi %0, %arg1 : i32
    %c0_i32 = arith.constant 0 : i32
    %c0_i32_0 = arith.constant 0 : i32
    %c0_i32_1 = arith.constant 0 : i32
    %c0_i32_2 = arith.constant 0 : i32
    return %1, %c0_i32, %c0_i32_0, %c0_i32_1 : i32, i32, i32, i32
  }
  func.func @transform_1(%arg0: i32, %arg1: i32) -> (i32, i32) {
    %c0_i32 = arith.constant 0 : i32
    %c0_i32_0 = arith.constant 0 : i32
    %c0_i32_1 = arith.constant 0 : i32
    return %c0_i32, %c0_i32_0 : i32, i32
  }
  func.func @transform_2(%arg0: i32, %arg1: i32) -> (i32, i32, i32, i32) {
    %c2_i32 = arith.constant 2 : i32
    %0 = arith.muli %arg0, %c2_i32 : i32
    %1 = arith.addi %0, %arg1 : i32
    %c0_i32 = arith.constant 0 : i32
    %c0_i32_0 = arith.constant 0 : i32
    %c0_i32_1 = arith.constant 0 : i32
    %c0_i32_2 = arith.constant 0 : i32
    return %1, %c0_i32, %c0_i32_0, %c0_i32_1 : i32, i32, i32, i32
  }
  func.func @transform_3(%arg0: i32, %arg1: i32) -> (i32, i32) {
    %c0_i32 = arith.constant 0 : i32
    %c0_i32_0 = arith.constant 0 : i32
    %c0_i32_1 = arith.constant 0 : i32
    return %c0_i32, %c0_i32_0 : i32, i32
  }
  func.func @transform_4(%arg0: i32, %arg1: i32) -> (i32, i32) {
    %c0_i32 = arith.constant 0 : i32
    %c0_i32_0 = arith.constant 0 : i32
    %c0_i32_1 = arith.constant 0 : i32
    return %c0_i32, %c0_i32_0 : i32, i32
  }
  func.func @transform_5(%arg0: i32, %arg1: i32) -> (i32, i32) {
    %c0_i32 = arith.constant 0 : i32
    %c0_i32_0 = arith.constant 0 : i32
    %c0_i32_1 = arith.constant 0 : i32
    return %c0_i32, %c0_i32_0 : i32, i32
  }
  func.func @transform_6(%arg0: i32, %arg1: i32) -> (i32, i32) {
    %c0_i32 = arith.constant 0 : i32
    %c0_i32_0 = arith.constant 0 : i32
    %c0_i32_1 = arith.constant 0 : i32
    return %c0_i32, %c0_i32_0 : i32, i32
  }
  func.func @transform_7(%arg0: i32, %arg1: i32) -> (i32, i32) {
    %c0_i32 = arith.constant 0 : i32
    %c0_i32_0 = arith.constant 0 : i32
    %c0_i32_1 = arith.constant 0 : i32
    return %c0_i32, %c0_i32_0 : i32, i32
  }
  func.func @transform_8(%arg0: i32, %arg1: i32) -> (i32, i32) {
    %c0_i32 = arith.constant 0 : i32
    %c0_i32_0 = arith.constant 0 : i32
    %c0_i32_1 = arith.constant 0 : i32
    return %c0_i32, %c0_i32_0 : i32, i32
  }
  func.func @transform_9(%arg0: i32, %arg1: i32) -> (i32, i32, i32, i32) {
    %c2_i32 = arith.constant 2 : i32
    %0 = arith.muli %arg0, %c2_i32 : i32
    %1 = arith.addi %0, %arg1 : i32
    %c0_i32 = arith.constant 0 : i32
    %c0_i32_0 = arith.constant 0 : i32
    %c0_i32_1 = arith.constant 0 : i32
    %c0_i32_2 = arith.constant 0 : i32
    return %1, %c0_i32, %c0_i32_0, %c0_i32_1 : i32, i32, i32, i32
  }
  func.func @transform_10(%arg0: i32, %arg1: i32) -> (i32, i32, i32, i32) {
    %c2_i32 = arith.constant 2 : i32
    %0 = arith.muli %arg0, %c2_i32 : i32
    %1 = arith.addi %0, %arg1 : i32
    %c0_i32 = arith.constant 0 : i32
    %c0_i32_0 = arith.constant 0 : i32
    %c0_i32_1 = arith.constant 0 : i32
    %c0_i32_2 = arith.constant 0 : i32
    return %1, %c0_i32, %c0_i32_0, %c0_i32_1 : i32, i32, i32, i32
  }
  func.func @transform_11(%arg0: i32, %arg1: i32) -> (i32, i32, i32, i32) {
    %c2_i32 = arith.constant 2 : i32
    %0 = arith.muli %arg0, %c2_i32 : i32
    %1 = arith.addi %0, %arg1 : i32
    %c0_i32 = arith.constant 0 : i32
    %c0_i32_0 = arith.constant 0 : i32
    %c0_i32_1 = arith.constant 0 : i32
    %c0_i32_2 = arith.constant 0 : i32
    return %1, %c0_i32, %c0_i32_0, %c0_i32_1 : i32, i32, i32, i32
  }
  func.func @transform_12(%arg0: i32, %arg1: i32) -> (i32, i32, i32) {
    %c2_i32 = arith.constant 2 : i32
    %0 = arith.muli %arg0, %c2_i32 : i32
    %1 = arith.addi %0, %arg1 : i32
    %c0_i32 = arith.constant 0 : i32
    %c0_i32_0 = arith.constant 0 : i32
    %c0_i32_1 = arith.constant 0 : i32
    return %1, %c0_i32, %c0_i32_0 : i32, i32, i32
  }
  func.func @transform_13(%arg0: i32, %arg1: i32) -> (i32, i32, i32) {
    %c0_i32 = arith.constant 0 : i32
    %c0_i32_0 = arith.constant 0 : i32
    %c0_i32_1 = arith.constant 0 : i32
    return %arg0, %c0_i32, %c0_i32_0 : i32, i32, i32
  }
}

</mosaic_0001>

<llo_original>
// kernel: tpu_custom_call.1
$region0: #{tpu_custom_call.1}
  #allocation0 [shape = 'u32[]', space=smem, size = 0x4, offset = 0x4, fixed_abs, tag = 'smem constant byte address 0x4 - core index']
  #allocation1 [shape = 'u32[72,128]{1,0:T(1,128)}', space=vmem, size = 0x9000, scoped, tag = 'internal scratch']
  %s0 = inlined_call_operand.hbm [shape: f32[4,2,16,16], index: 0, kind: input, shape index: {}]
  %s1 = inlined_call_operand.hbm [shape: f32[16,16], index: 1, kind: input, shape index: {}]
  %s2 = inlined_call_operand.hbm [shape: f32[4,2,16,16], index: 2, kind: input, shape index: {}]
  %s3 = inlined_call_operand.hbm [shape: f32[16,16], index: 3, kind: input, shape index: {}]
  %s4 = inlined_call_operand.hbm [shape: f32[16,16], index: 4, kind: input, shape index: {}]
  %s5 = inlined_call_operand.hbm [shape: f32[16,16], index: 5, kind: input, shape index: {}]
  %s6 = inlined_call_operand.hbm [shape: f32[16,16], index: 6, kind: input, shape index: {}]
  %s7 = inlined_call_operand.hbm [shape: f32[16,16], index: 7, kind: input, shape index: {}]
  %s8 = inlined_call_operand.hbm [shape: f32[16,16], index: 8, kind: input, shape index: {}]
  %s9 = inlined_call_operand.hbm [shape: f32[4,2,16,16], index: 9, kind: output, shape index: {0}]
  %s10 = inlined_call_operand.hbm [shape: f32[4,2,16,16], index: 10, kind: output, shape index: {1}]
  %s11 = inlined_call_operand.hbm [shape: f32[4,2,16,16], index: 11, kind: output, shape index: {2}]
  %s12 = inlined_call_operand.hbm [shape: f32[4,16,16], index: 12, kind: output, shape index: {3}]
  %s13 = inlined_call_operand.hbm [shape: f32[2,16,16], index: 13, kind: output, shape index: {4}]
  %14 = xla_tuple %s9, %s10, %s11, %s12, %s13
  %s15 = sld [smem:[#allocation0]]
  $region141: #{tpu_custom_call.1} parent=0
    _
  %s17 = ssub.s32 1, %s15
  %s18 = scalar_select 0, %s17, %s15
  $region1: #{tpu_custom_call.1} parent=0
    #allocation2 [shape = 'u8[32768]{0}', space=vmem, size = 0x8000, scoped, tag = 'input window, operand 0']
    #allocation3 [shape = 's32[2]{0}', space=sflag, size = 0x8, scoped, tag = 'scoped memory for tpu_custom_call.1']
    #allocation4 [shape = 's32[2]{0}', space=sflag, size = 0x8, scoped, tag = 'scoped memory for tpu_custom_call.1']
    #allocation5 [shape = 'u8[8192]{0}', space=vmem, size = 0x2000, scoped, tag = 'input window, operand 1, single buffered']
    #allocation6 [shape = 's32[1]{0}', space=sflag, size = 0x4, scoped, tag = 'scoped memory for tpu_custom_call.1']
    #allocation7 [shape = 'u8[32768]{0}', space=vmem, size = 0x8000, scoped, tag = 'input window, operand 2']
    #allocation8 [shape = 'u8[8192]{0}', space=vmem, size = 0x2000, scoped, tag = 'input window, operand 3, single buffered']
    #allocation9 [shape = 'u8[8192]{0}', space=vmem, size = 0x2000, scoped, tag = 'input window, operand 4, single buffered']
    #allocation10 [shape = 's32[1]{0}', space=sflag, size = 0x4, scoped, tag = 'scoped memory for tpu_custom_call.1']
    #allocation11 [shape = 'u8[8192]{0}', space=vmem, size = 0x2000, scoped, tag = 'input window, operand 5, single buffered']
    #allocation12 [shape = 'u8[8192]{0}', space=vmem, size = 0x2000, scoped, tag = 'input window, operand 6, single buffered']
    #allocation13 [shape = 's32[1]{0}', space=sflag, size = 0x4, scoped, tag = 'scoped memory for tpu_custom_call.1']
    #allocation14 [shape = 'u8[8192]{0}', space=vmem, size = 0x2000, scoped, tag = 'input window, operand 7, single buffered']
    #allocation15 [shape = 'u8[8192]{0}', space=vmem, size = 0x2000, scoped, tag = 'input window, operand 8, single buffered']
    #allocation16 [shape = 's32[1]{0}', space=sflag, size = 0x4, scoped, tag = 'scoped memory for tpu_custom_call.1']
    #allocation17 [shape = 'u8[32768]{0}', space=vmem, size = 0x8000, scoped, tag = 'output window, operand 0']
    #allocation18 [shape = 'u8[32768]{0}', space=vmem, size = 0x8000, scoped, tag = 'output window, operand 1']
    #allocation19 [shape = 's32[2]{0}', space=sflag, size = 0x8, scoped, tag = 'scoped memory for tpu_custom_call.1']
    #allocation20 [shape = 'u8[32768]{0}', space=vmem, size = 0x8000, scoped, tag = 'output window, operand 2']
    #allocation21 [shape = 'u8[16384]{0}', space=vmem, size = 0x4000, scoped, tag = 'output window, operand 3']
    #allocation22 [shape = 's32[2]{0}', space=sflag, size = 0x8, scoped, tag = 'scoped memory for tpu_custom_call.1']
    #allocation23 [shape = 'u8[16384]{0}', space=vmem, size = 0x4000, scoped, tag = 'output window, operand 4']
    %19 = vsyncpa [#allocation3], 0
    %s20 = scalar_lea.sflag [#allocation3], 1
    %21 = vsyncpa %s20, 0
    %22 = vsyncpa [#allocation6], 0
    %23 = vsyncpa [#allocation10], 0
    %24 = vsyncpa [#allocation13], 0
    %25 = vsyncpa [#allocation16], 0
    %26 = vsyncpa [#allocation4], 0
    %s27 = scalar_lea.sflag [#allocation4], 1
    %28 = vsyncpa %s27, 0
    %29 = vsyncpa [#allocation19], 0
    %s30 = scalar_lea.sflag [#allocation19], 1
    %31 = vsyncpa %s30, 0
    %32 = vsyncpa [#allocation22], 0
    %s33 = scalar_lea.sflag [#allocation22], 1
    %34 = vsyncpa %s33, 0
    loop: start=0, step=1, limit=6
    $region2: #{tpu_custom_call.1} parent=1 // loop_pre_header
      _
    $region3: #{tpu_custom_call.1} parent=1 // loop_header
      %s36 = sphi 0, %s40
      %p37 = scmp.ge.s32.totalorder %s36, 6
      %s43 = sphi 0, %s55
      %s44 = sphi 0, %s51
      %s45 = sphi 0, %s43
      %s46 = sphi 0, %s44
      %s47 = sphi 0, %s45
      %s48 = sphi 0, %s46
      %s62 = sphi 0, %s64
      %s65 = sphi 0, %s62
      %s66 = sphi 0, %s65
      %s82 = sphi 0, %s66
      %s86 = sphi 0, %s86
      %s88 = sphi 0, %s86
      %s89 = sphi 0, %s88
      %s103 = sphi 0, %s89
      %s113 = sphi 0, %s115
      %s116 = sphi 0, %s113
      %s117 = sphi 0, %s116
      %s133 = sphi 0, %s117
      %s137 = sphi 0, %s137
      %s139 = sphi 0, %s137
      %s140 = sphi 0, %s139
      %s154 = sphi 0, %s140
      %s158 = sphi 0, %s158
      %s160 = sphi 0, %s158
      %s161 = sphi 0, %s160
      %s175 = sphi 0, %s161
      %s179 = sphi 0, %s179
      %s181 = sphi 0, %s179
      %s182 = sphi 0, %s181
      %s196 = sphi 0, %s182
      %s200 = sphi 0, %s200
      %s202 = sphi 0, %s200
      %s203 = sphi 0, %s202
      %s217 = sphi 0, %s203
      %s221 = sphi 0, %s221
      %s223 = sphi 0, %s221
      %s224 = sphi 0, %s223
      %s238 = sphi 0, %s224
      %s242 = sphi 0, %s242
      %s244 = sphi 0, %s242
      %s245 = sphi 0, %s244
      %s259 = sphi 0, %s245
      %s269 = sphi 0, %s271
      %s272 = sphi 0, %s269
      %s273 = sphi 0, %s272
      %s289 = sphi 0, %s273
      %s299 = sphi 0, %s301
      %s302 = sphi 0, %s299
      %s303 = sphi 0, %s302
      %s319 = sphi 0, %s303
      %s329 = sphi 0, %s331
      %s332 = sphi 0, %s329
      %s333 = sphi 0, %s332
      %s349 = sphi 0, %s333
      %s359 = sphi 0, %s361
      %s362 = sphi 0, %s359
      %s363 = sphi 0, %s362
      %s379 = sphi 0, %s363
      %s385 = sphi 0, %s387
      %s388 = sphi 0, %s385
      %s389 = sphi 0, %s388
      %s405 = sphi 0, %s389
    $region4: #{tpu_custom_call.1} parent=1 // loop_header_branch
      %39 = sbr.rel (%p37) target = $region8
    $region5: #{tpu_custom_call.1} parent=1 // loop_body
      %s41 = ssub.s32 %s36, 1
      %s42 = ssub.s32 %s36, 2
      %s49 = sadd.s32 1, %s44
      %p50 = scmp.ge.s32.totalorder %s49, 2
      %s51 = scalar_select %p50, 0, %s49
      %s52 = sadd.s32 1, %s43
      %s53 = scalar_select %p50, %s52, %s43
      %p54 = scmp.ge.s32.totalorder %s53, 2
      %s55 = scalar_select %p54, 0, %s53
      %s56 = smul.u32 %s43, 2
      %s57 = sadd.s32 %s56, %s44
      %s58 = smul.u32 %s55, 2
      %s59 = sadd.s32 %s58, %s51
      %s60 = ssub.s32 %s57, %s59
      %p61 = scmp.eq.s32.totalorder %s60, 0
      %s63 = sadd.s32 %s62, 1
      %s64 = scalar_select %p61, %s62, %s63
      %p67 = pneg %p61
      %p68 = scmp.eq.s32.totalorder %s36, 3
      %p69 = por %p67, %p68
      %p70 = scmp.ne.s32.totalorder %s62, %s65
      %p71 = scmp.eq.s32.totalorder %s36, 0
      %p72 = por %p70, %p71
      %p73 = scmp.ne.s32.totalorder %s62, %s65
      %p74 = scmp.eq.s32.totalorder %s41, 3
      %p75 = por %p73, %p74
      %p76 = scmp.ne.s32.totalorder %s65, %s66
      %p77 = scmp.eq.s32.totalorder %s41, 0
      %p78 = por %p76, %p77
      %p79 = scmp.ne.s32.totalorder %s65, %s66
      %p80 = scmp.eq.s32.totalorder %s42, 3
      %p81 = por %p79, %p80
      %p83 = scmp.ne.s32.totalorder %s66, %s82
      %p84 = scmp.eq.s32.totalorder %s42, 0
      %p85 = por %p83, %p84
      %s87 = sadd.s32 %s86, 1
      %p90 = scmp.eq.s32.totalorder %s36, 3
      %p91 = scmp.ne.s32.totalorder %s86, %s88
      %p92 = scmp.eq.s32.totalorder %s36, 0
      %p93 = por %p91, %p92
      %p94 = scmp.ne.s32.totalorder %s86, %s88
      %p95 = scmp.eq.s32.totalorder %s41, 3
      %p96 = por %p94, %p95
      %p97 = scmp.ne.s32.totalorder %s88, %s89
      %p98 = scmp.eq.s32.totalorder %s41, 0
      %p99 = por %p97, %p98
      %p100 = scmp.ne.s32.totalorder %s88, %s89
      %p101 = scmp.eq.s32.totalorder %s42, 3
      %p102 = por %p100, %p101
      %p104 = scmp.ne.s32.totalorder %s89, %s103
      %p105 = scmp.eq.s32.totalorder %s42, 0
      %p106 = por %p104, %p105
      %s107 = smul.u32 %s43, 2
      %s108 = sadd.s32 %s107, %s44
      %s109 = smul.u32 %s55, 2
      %s110 = sadd.s32 %s109, %s51
      %s111 = ssub.s32 %s108, %s110
      %p112 = scmp.eq.s32.totalorder %s111, 0
      %s114 = sadd.s32 %s113, 1
      %s115 = scalar_select %p112, %s113, %s114
      %p118 = pneg %p112
      %p119 = scmp.eq.s32.totalorder %s36, 3
      %p120 = por %p118, %p119
      %p121 = scmp.ne.s32.totalorder %s113, %s116
      %p122 = scmp.eq.s32.totalorder %s36, 0
      %p123 = por %p121, %p122
      %p124 = scmp.ne.s32.totalorder %s113, %s116
      %p125 = scmp.eq.s32.totalorder %s41, 3
      %p126 = por %p124, %p125
      %p127 = scmp.ne.s32.totalorder %s116, %s117
      %p128 = scmp.eq.s32.totalorder %s41, 0
      %p129 = por %p127, %p128
      %p130 = scmp.ne.s32.totalorder %s116, %s117
      %p131 = scmp.eq.s32.totalorder %s42, 3
      %p132 = por %p130, %p131
      %p134 = scmp.ne.s32.totalorder %s117, %s133
      %p135 = scmp.eq.s32.totalorder %s42, 0
      %p136 = por %p134, %p135
      %s138 = sadd.s32 %s137, 1
      %p141 = scmp.eq.s32.totalorder %s36, 3
      %p142 = scmp.ne.s32.totalorder %s137, %s139
      %p143 = scmp.eq.s32.totalorder %s36, 0
      %p144 = por %p142, %p143
      %p145 = scmp.ne.s32.totalorder %s137, %s139
      %p146 = scmp.eq.s32.totalorder %s41, 3
      %p147 = por %p145, %p146
      %p148 = scmp.ne.s32.totalorder %s139, %s140
      %p149 = scmp.eq.s32.totalorder %s41, 0
      %p150 = por %p148, %p149
      %p151 = scmp.ne.s32.totalorder %s139, %s140
      %p152 = scmp.eq.s32.totalorder %s42, 3
      %p153 = por %p151, %p152
      %p155 = scmp.ne.s32.totalorder %s140, %s154
      %p156 = scmp.eq.s32.totalorder %s42, 0
      %p157 = por %p155, %p156
      %s159 = sadd.s32 %s158, 1
      %p162 = scmp.eq.s32.totalorder %s36, 3
      %p163 = scmp.ne.s32.totalorder %s158, %s160
      %p164 = scmp.eq.s32.totalorder %s36, 0
      %p165 = por %p163, %p164
      %p166 = scmp.ne.s32.totalorder %s158, %s160
      %p167 = scmp.eq.s32.totalorder %s41, 3
      %p168 = por %p166, %p167
      %p169 = scmp.ne.s32.totalorder %s160, %s161
      %p170 = scmp.eq.s32.totalorder %s41, 0
      %p171 = por %p169, %p170
      %p172 = scmp.ne.s32.totalorder %s160, %s161
      %p173 = scmp.eq.s32.totalorder %s42, 3
      %p174 = por %p172, %p173
      %p176 = scmp.ne.s32.totalorder %s161, %s175
      %p177 = scmp.eq.s32.totalorder %s42, 0
      %p178 = por %p176, %p177
      %s180 = sadd.s32 %s179, 1
      %p183 = scmp.eq.s32.totalorder %s36, 3
      %p184 = scmp.ne.s32.totalorder %s179, %s181
      %p185 = scmp.eq.s32.totalorder %s36, 0
      %p186 = por %p184, %p185
      %p187 = scmp.ne.s32.totalorder %s179, %s181
      %p188 = scmp.eq.s32.totalorder %s41, 3
      %p189 = por %p187, %p188
      %p190 = scmp.ne.s32.totalorder %s181, %s182
      %p191 = scmp.eq.s32.totalorder %s41, 0
      %p192 = por %p190, %p191
      %p193 = scmp.ne.s32.totalorder %s181, %s182
      %p194 = scmp.eq.s32.totalorder %s42, 3
      %p195 = por %p193, %p194
      %p197 = scmp.ne.s32.totalorder %s182, %s196
      %p198 = scmp.eq.s32.totalorder %s42, 0
      %p199 = por %p197, %p198
      %s201 = sadd.s32 %s200, 1
      %p204 = scmp.eq.s32.totalorder %s36, 3
      %p205 = scmp.ne.s32.totalorder %s200, %s202
      %p206 = scmp.eq.s32.totalorder %s36, 0
      %p207 = por %p205, %p206
      %p208 = scmp.ne.s32.totalorder %s200, %s202
      %p209 = scmp.eq.s32.totalorder %s41, 3
      %p210 = por %p208, %p209
      %p211 = scmp.ne.s32.totalorder %s202, %s203
      %p212 = scmp.eq.s32.totalorder %s41, 0
      %p213 = por %p211, %p212
      %p214 = scmp.ne.s32.totalorder %s202, %s203
      %p215 = scmp.eq.s32.totalorder %s42, 3
      %p216 = por %p214, %p215
      %p218 = scmp.ne.s32.totalorder %s203, %s217
      %p219 = scmp.eq.s32.totalorder %s42, 0
      %p220 = por %p218, %p219
      %s222 = sadd.s32 %s221, 1
      %p225 = scmp.eq.s32.totalorder %s36, 3
      %p226 = scmp.ne.s32.totalorder %s221, %s223
      %p227 = scmp.eq.s32.totalorder %s36, 0
      %p228 = por %p226, %p227
      %p229 = scmp.ne.s32.totalorder %s221, %s223
      %p230 = scmp.eq.s32.totalorder %s41, 3
      %p231 = por %p229, %p230
      %p232 = scmp.ne.s32.totalorder %s223, %s224
      %p233 = scmp.eq.s32.totalorder %s41, 0
      %p234 = por %p232, %p233
      %p235 = scmp.ne.s32.totalorder %s223, %s224
      %p236 = scmp.eq.s32.totalorder %s42, 3
      %p237 = por %p235, %p236
      %p239 = scmp.ne.s32.totalorder %s224, %s238
      %p240 = scmp.eq.s32.totalorder %s42, 0
      %p241 = por %p239, %p240
      %s243 = sadd.s32 %s242, 1
      %p246 = scmp.eq.s32.totalorder %s36, 3
      %p247 = scmp.ne.s32.totalorder %s242, %s244
      %p248 = scmp.eq.s32.totalorder %s36, 0
      %p249 = por %p247, %p248
      %p250 = scmp.ne.s32.totalorder %s242, %s244
      %p251 = scmp.eq.s32.totalorder %s41, 3
      %p252 = por %p250, %p251
      %p253 = scmp.ne.s32.totalorder %s244, %s245
      %p254 = scmp.eq.s32.totalorder %s41, 0
      %p255 = por %p253, %p254
      %p256 = scmp.ne.s32.totalorder %s244, %s245
      %p257 = scmp.eq.s32.totalorder %s42, 3
      %p258 = por %p256, %p257
      %p260 = scmp.ne.s32.totalorder %s245, %s259
      %p261 = scmp.eq.s32.totalorder %s42, 0
      %p262 = por %p260, %p261
      %s263 = smul.u32 %s43, 2
      %s264 = sadd.s32 %s263, %s44
      %s265 = smul.u32 %s55, 2
      %s266 = sadd.s32 %s265, %s51
      %s267 = ssub.s32 %s264, %s266
      %p268 = scmp.eq.s32.totalorder %s267, 0
      %s270 = sadd.s32 %s269, 1
      %s271 = scalar_select %p268, %s269, %s270
      %p274 = pneg %p268
      %p275 = scmp.eq.s32.totalorder %s36, 3
      %p276 = por %p274, %p275
      %p277 = scmp.ne.s32.totalorder %s269, %s272
      %p278 = scmp.eq.s32.totalorder %s36, 0
      %p279 = por %p277, %p278
      %p280 = scmp.ne.s32.totalorder %s269, %s272
      %p281 = scmp.eq.s32.totalorder %s41, 3
      %p282 = por %p280, %p281
      %p283 = scmp.ne.s32.totalorder %s272, %s273
      %p284 = scmp.eq.s32.totalorder %s41, 0
      %p285 = por %p283, %p284
      %p286 = scmp.ne.s32.totalorder %s272, %s273
      %p287 = scmp.eq.s32.totalorder %s42, 3
      %p288 = por %p286, %p287
      %p290 = scmp.ne.s32.totalorder %s273, %s289
      %p291 = scmp.eq.s32.totalorder %s42, 0
      %p292 = por %p290, %p291
      %s293 = smul.u32 %s43, 2
      %s294 = sadd.s32 %s293, %s44
      %s295 = smul.u32 %s55, 2
      %s296 = sadd.s32 %s295, %s51
      %s297 = ssub.s32 %s294, %s296
      %p298 = scmp.eq.s32.totalorder %s297, 0
      %s300 = sadd.s32 %s299, 1
      %s301 = scalar_select %p298, %s299, %s300
      %p304 = pneg %p298
      %p305 = scmp.eq.s32.totalorder %s36, 3
      %p306 = por %p304, %p305
      %p307 = scmp.ne.s32.totalorder %s299, %s302
      %p308 = scmp.eq.s32.totalorder %s36, 0
      %p309 = por %p307, %p308
      %p310 = scmp.ne.s32.totalorder %s299, %s302
      %p311 = scmp.eq.s32.totalorder %s41, 3
      %p312 = por %p310, %p311
      %p313 = scmp.ne.s32.totalorder %s302, %s303
      %p314 = scmp.eq.s32.totalorder %s41, 0
      %p315 = por %p313, %p314
      %p316 = scmp.ne.s32.totalorder %s302, %s303
      %p317 = scmp.eq.s32.totalorder %s42, 3
      %p318 = por %p316, %p317
      %p320 = scmp.ne.s32.totalorder %s303, %s319
      %p321 = scmp.eq.s32.totalorder %s42, 0
      %p322 = por %p320, %p321
      %s323 = smul.u32 %s43, 2
      %s324 = sadd.s32 %s323, %s44
      %s325 = smul.u32 %s55, 2
      %s326 = sadd.s32 %s325, %s51
      %s327 = ssub.s32 %s324, %s326
      %p328 = scmp.eq.s32.totalorder %s327, 0
      %s330 = sadd.s32 %s329, 1
      %s331 = scalar_select %p328, %s329, %s330
      %p334 = pneg %p328
      %p335 = scmp.eq.s32.totalorder %s36, 3
      %p336 = por %p334, %p335
      %p337 = scmp.ne.s32.totalorder %s329, %s332
      %p338 = scmp.eq.s32.totalorder %s36, 0
      %p339 = por %p337, %p338
      %p340 = scmp.ne.s32.totalorder %s329, %s332
      %p341 = scmp.eq.s32.totalorder %s41, 3
      %p342 = por %p340, %p341
      %p343 = scmp.ne.s32.totalorder %s332, %s333
      %p344 = scmp.eq.s32.totalorder %s41, 0
      %p345 = por %p343, %p344
      %p346 = scmp.ne.s32.totalorder %s332, %s333
      %p347 = scmp.eq.s32.totalorder %s42, 3
      %p348 = por %p346, %p347
      %p350 = scmp.ne.s32.totalorder %s333, %s349
      %p351 = scmp.eq.s32.totalorder %s42, 0
      %p352 = por %p350, %p351
      %s353 = smul.u32 %s43, 2
      %s354 = sadd.s32 %s353, %s44
      %s355 = smul.u32 %s55, 2
      %s356 = sadd.s32 %s355, %s51
      %s357 = ssub.s32 %s354, %s356
      %p358 = scmp.eq.s32.totalorder %s357, 0
      %s360 = sadd.s32 %s359, 1
      %s361 = scalar_select %p358, %s359, %s360
      %p364 = pneg %p358
      %p365 = scmp.eq.s32.totalorder %s36, 3
      %p366 = por %p364, %p365
      %p367 = scmp.ne.s32.totalorder %s359, %s362
      %p368 = scmp.eq.s32.totalorder %s36, 0
      %p369 = por %p367, %p368
      %p370 = scmp.ne.s32.totalorder %s359, %s362
      %p371 = scmp.eq.s32.totalorder %s41, 3
      %p372 = por %p370, %p371
      %p373 = scmp.ne.s32.totalorder %s362, %s363
      %p374 = scmp.eq.s32.totalorder %s41, 0
      %p375 = por %p373, %p374
      %p376 = scmp.ne.s32.totalorder %s362, %s363
      %p377 = scmp.eq.s32.totalorder %s42, 3
      %p378 = por %p376, %p377
      %p380 = scmp.ne.s32.totalorder %s363, %s379
      %p381 = scmp.eq.s32.totalorder %s42, 0
      %p382 = por %p380, %p381
      %s383 = ssub.s32 %s43, %s55
      %p384 = scmp.eq.s32.totalorder %s383, 0
      %s386 = sadd.s32 %s385, 1
      %s387 = scalar_select %p384, %s385, %s386
      %p390 = pneg %p384
      %p391 = scmp.eq.s32.totalorder %s36, 3
      %p392 = por %p390, %p391
      %p393 = scmp.ne.s32.totalorder %s385, %s388
      %p394 = scmp.eq.s32.totalorder %s36, 0
      %p395 = por %p393, %p394
      %p396 = scmp.ne.s32.totalorder %s385, %s388
      %p397 = scmp.eq.s32.totalorder %s41, 3
      %p398 = por %p396, %p397
      %p399 = scmp.ne.s32.totalorder %s388, %s389
      %p400 = scmp.eq.s32.totalorder %s41, 0
      %p401 = por %p399, %p400
      %p402 = scmp.ne.s32.totalorder %s388, %s389
      %p403 = scmp.eq.s32.totalorder %s42, 3
      %p404 = por %p402, %p403
      %p406 = scmp.ne.s32.totalorder %s389, %s405
      %p407 = scmp.eq.s32.totalorder %s42, 0
      %p408 = por %p406, %p407
      %p409 = scmp.le.s32.totalorder 1, %s36
      %p410 = scmp.lt.s32.totalorder %s36, 5
      %p411 = pnand %p409, %p410
      %p412 = pneg %p411
      // Predicated region
      $region9: #{tpu_custom_call.1} parent=5 // pred_check
        _
      $region10: #{tpu_custom_call.1} parent=5 // pred_check_branch
        %414 = sbr.rel (%p411) target = $region12
      $region11: #{tpu_custom_call.1} parent=5 // pred_region
        %s415 = ssub.s32 %s36, 1
        // Predicated region
        $region13: #{tpu_custom_call.1} parent=11 // pred_check
          %p416 = pneg %p99
        $region14: #{tpu_custom_call.1} parent=11 // pred_check_branch
          %418 = sbr.rel (%p416) target = $region16
        $region15: #{tpu_custom_call.1} parent=11 // pred_region
          %420 = vsyncadd [#allocation6], 0
          %s421 = sshll.u32 %s1, 4
          %s422 = int_to_ptr.hbm [resolvable:$true] %s421
          %s423 = sshll.u32 [#allocation5], 4
          %s424 = int_to_ptr.vmem [resolvable:$true] %s423
          %429 = dma.hbm_to_vmem [thread:$0]  %s422, 256, %s424, [#allocation6], 128, 128, 8
        $region16: #{tpu_custom_call.1} parent=11 // pred_fallthru
          _
        // Predicated region
        $region17: #{tpu_custom_call.1} parent=11 // pred_check
          %p430 = pneg %p150
        $region18: #{tpu_custom_call.1} parent=11 // pred_check_branch
          %432 = sbr.rel (%p430) target = $region20
        $region19: #{tpu_custom_call.1} parent=11 // pred_region
          %434 = vsyncadd [#allocation6], 0
          %s435 = sshll.u32 %s3, 4
          %s436 = int_to_ptr.hbm [resolvable:$true] %s435
          %s437 = sshll.u32 [#allocation8], 4
          %s438 = int_to_ptr.vmem [resolvable:$true] %s437
          %443 = dma.hbm_to_vmem [thread:$0]  %s436, 256, %s438, [#allocation6], 128, 128, 8
        $region20: #{tpu_custom_call.1} parent=11 // pred_fallthru
          _
        // Predicated region
        $region21: #{tpu_custom_call.1} parent=11 // pred_check
          %p444 = pneg %p171
        $region22: #{tpu_custom_call.1} parent=11 // pred_check_branch
          %446 = sbr.rel (%p444) target = $region24
        $region23: #{tpu_custom_call.1} parent=11 // pred_region
          %448 = vsyncadd [#allocation10], 0
          %s449 = sshll.u32 %s4, 4
          %s450 = int_to_ptr.hbm [resolvable:$true] %s449
          %s451 = sshll.u32 [#allocation9], 4
          %s452 = int_to_ptr.vmem [resolvable:$true] %s451
          %457 = dma.hbm_to_vmem [thread:$0]  %s450, 256, %s452, [#allocation10], 128, 128, 8
        $region24: #{tpu_custom_call.1} parent=11 // pred_fallthru
          _
        // Predicated region
        $region25: #{tpu_custom_call.1} parent=11 // pred_check
          %p458 = pneg %p192
        $region26: #{tpu_custom_call.1} parent=11 // pred_check_branch
          %460 = sbr.rel (%p458) target = $region28
        $region27: #{tpu_custom_call.1} parent=11 // pred_region
          %462 = vsyncadd [#allocation10], 0
          %s463 = sshll.u32 %s5, 4
          %s464 = int_to_ptr.hbm [resolvable:$true] %s463
          %s465 = sshll.u32 [#allocation11], 4
          %s466 = int_to_ptr.vmem [resolvable:$true] %s465
          %471 = dma.hbm_to_vmem [thread:$0]  %s464, 256, %s466, [#allocation10], 128, 128, 8
        $region28: #{tpu_custom_call.1} parent=11 // pred_fallthru
          _
        // Predicated region
        $region29: #{tpu_custom_call.1} parent=11 // pred_check
          %p472 = pneg %p213
        $region30: #{tpu_custom_call.1} parent=11 // pred_check_branch
          %474 = sbr.rel (%p472) target = $region32
        $region31: #{tpu_custom_call.1} parent=11 // pred_region
          %476 = vsyncadd [#allocation13], 0
          %s477 = sshll.u32 %s6, 4
          %s478 = int_to_ptr.hbm [resolvable:$true] %s477
          %s479 = sshll.u32 [#allocation12], 4
          %s480 = int_to_ptr.vmem [resolvable:$true] %s479
          %485 = dma.hbm_to_vmem [thread:$0]  %s478, 256, %s480, [#allocation13], 128, 128, 8
        $region32: #{tpu_custom_call.1} parent=11 // pred_fallthru
          _
        // Predicated region
        $region33: #{tpu_custom_call.1} parent=11 // pred_check
          %p486 = pneg %p234
        $region34: #{tpu_custom_call.1} parent=11 // pred_check_branch
          %488 = sbr.rel (%p486) target = $region36
        $region35: #{tpu_custom_call.1} parent=11 // pred_region
          %490 = vsyncadd [#allocation13], 0
          %s491 = sshll.u32 %s7, 4
          %s492 = int_to_ptr.hbm [resolvable:$true] %s491
          %s493 = sshll.u32 [#allocation14], 4
          %s494 = int_to_ptr.vmem [resolvable:$true] %s493
          %499 = dma.hbm_to_vmem [thread:$0]  %s492, 256, %s494, [#allocation13], 128, 128, 8
        $region36: #{tpu_custom_call.1} parent=11 // pred_fallthru
          _
        // Predicated region
        $region37: #{tpu_custom_call.1} parent=11 // pred_check
          %p500 = pneg %p255
        $region38: #{tpu_custom_call.1} parent=11 // pred_check_branch
          %502 = sbr.rel (%p500) target = $region40
        $region39: #{tpu_custom_call.1} parent=11 // pred_region
          %504 = vsyncadd [#allocation16], 0
          %s505 = sshll.u32 %s8, 4
          %s506 = int_to_ptr.hbm [resolvable:$true] %s505
          %s507 = sshll.u32 [#allocation15], 4
          %s508 = int_to_ptr.vmem [resolvable:$true] %s507
          %513 = dma.hbm_to_vmem [thread:$0]  %s506, 256, %s508, [#allocation16], 128, 128, 8
        $region40: #{tpu_custom_call.1} parent=11 // pred_fallthru
          _
      $region12: #{tpu_custom_call.1} parent=5 // pred_fallthru
        _
      %p514 = scmp.lt.s32.totalorder %s36, 4
      // Predicated region
      $region41: #{tpu_custom_call.1} parent=5 // pred_check
        %p515 = pneg %p514
      $region42: #{tpu_custom_call.1} parent=5 // pred_check_branch
        %517 = sbr.rel (%p515) target = $region44
      $region43: #{tpu_custom_call.1} parent=5 // pred_region
        // Predicated region
        $region45: #{tpu_custom_call.1} parent=43 // pred_check
          %p518 = pneg %p72
        $region46: #{tpu_custom_call.1} parent=43 // pred_check_branch
          %520 = sbr.rel (%p518) target = $region48
        $region47: #{tpu_custom_call.1} parent=43 // pred_region
          %s521 = sand.u32 %s36, 1
          %s522 = scalar_lea.sflag [#allocation3], %s521
          %s523 = sand.u32 %s62, 1
          %s524 = smul.addr %s523, 32
          %s525 = scalar_lea.vmem [#allocation2], %s524
          %s526 = smul.u32 %s43, 2
          %s527 = sadd.s32 %s526, %s44
          %529 = vsyncadd %s522, 0
          %s530 = smul.addr %s527, 4
          %s531 = smul.addr %s530, 8
          %s532 = scalar_lea.hbm %s0, %s531
          %s533 = sshll.u32 %s532, 4
          %s534 = int_to_ptr.hbm [resolvable:$true] %s533
          %s535 = sshll.u32 %s525, 4
          %s536 = int_to_ptr.vmem [resolvable:$true] %s535
          %541 = dma.hbm_to_vmem [thread:$0]  %s534, 512, %s536, %s522, 128, 128, 8
        $region48: #{tpu_custom_call.1} parent=43 // pred_fallthru
          _
        // Predicated region
        $region49: #{tpu_custom_call.1} parent=43 // pred_check
          %p542 = pneg %p123
        $region50: #{tpu_custom_call.1} parent=43 // pred_check_branch
          %544 = sbr.rel (%p542) target = $region52
        $region51: #{tpu_custom_call.1} parent=43 // pred_region
          %s545 = sand.u32 %s36, 1
          %s546 = scalar_lea.sflag [#allocation3], %s545
          %s547 = sand.u32 %s113, 1
          %s548 = smul.addr %s547, 32
          %s549 = scalar_lea.vmem [#allocation7], %s548
          %s550 = smul.u32 %s43, 2
          %s551 = sadd.s32 %s550, %s44
          %553 = vsyncadd %s546, 0
          %s554 = smul.addr %s551, 4
          %s555 = smul.addr %s554, 8
          %s556 = scalar_lea.hbm %s2, %s555
          %s557 = sshll.u32 %s556, 4
          %s558 = int_to_ptr.hbm [resolvable:$true] %s557
          %s559 = sshll.u32 %s549, 4
          %s560 = int_to_ptr.vmem [resolvable:$true] %s559
          %565 = dma.hbm_to_vmem [thread:$0]  %s558, 512, %s560, %s546, 128, 128, 8
        $region52: #{tpu_custom_call.1} parent=43 // pred_fallthru
          _
      $region44: #{tpu_custom_call.1} parent=5 // pred_fallthru
        _
      %p566 = scmp.le.s32.totalorder 1, %s36
      %p567 = scmp.lt.s32.totalorder %s36, 5
      %p568 = pnand %p566, %p567
      %p569 = pneg %p568
      // Predicated region
      $region53: #{tpu_custom_call.1} parent=5 // pred_check
        _
      $region54: #{tpu_custom_call.1} parent=5 // pred_check_branch
        %571 = sbr.rel (%p568) target = $region56
      $region55: #{tpu_custom_call.1} parent=5 // pred_region
        %s572 = ssub.s32 %s36, 1
        %s573 = sand.u32 %s41, 1
        %s574 = scalar_lea.sflag [#allocation3], %s573
        %s575 = sand.u32 %s65, 1
        %s576 = smul.addr %s575, 32
        %s577 = scalar_lea.vmem [#allocation2], %s576
        // Predicated region
        $region57: #{tpu_custom_call.1} parent=55 // pred_check
          %p578 = pneg %p78
        $region58: #{tpu_custom_call.1} parent=55 // pred_check_branch
          %580 = sbr.rel (%p578) target = $region60
        $region59: #{tpu_custom_call.1} parent=55 // pred_region
          %582 = dma.done %s574, 512
        $region60: #{tpu_custom_call.1} parent=55 // pred_fallthru
          _
        // Predicated region
        $region61: #{tpu_custom_call.1} parent=55 // pred_check
          %p583 = pneg %p99
        $region62: #{tpu_custom_call.1} parent=55 // pred_check_branch
          %585 = sbr.rel (%p583) target = $region64
        $region63: #{tpu_custom_call.1} parent=55 // pred_region
          %587 = dma.done [#allocation6], 256
        $region64: #{tpu_custom_call.1} parent=55 // pred_fallthru
          _
        %s588 = sand.u32 %s41, 1
        %s589 = scalar_lea.sflag [#allocation3], %s588
        %s590 = sand.u32 %s116, 1
        %s591 = smul.addr %s590, 32
        %s592 = scalar_lea.vmem [#allocation7], %s591
        // Predicated region
        $region65: #{tpu_custom_call.1} parent=55 // pred_check
          %p593 = pneg %p129
        $region66: #{tpu_custom_call.1} parent=55 // pred_check_branch
          %595 = sbr.rel (%p593) target = $region68
        $region67: #{tpu_custom_call.1} parent=55 // pred_region
          %597 = dma.done %s589, 512
        $region68: #{tpu_custom_call.1} parent=55 // pred_fallthru
          _
        // Predicated region
        $region69: #{tpu_custom_call.1} parent=55 // pred_check
          %p598 = pneg %p150
        $region70: #{tpu_custom_call.1} parent=55 // pred_check_branch
          %600 = sbr.rel (%p598) target = $region72
        $region71: #{tpu_custom_call.1} parent=55 // pred_region
          %602 = dma.done [#allocation6], 256
        $region72: #{tpu_custom_call.1} parent=55 // pred_fallthru
          _
        // Predicated region
        $region73: #{tpu_custom_call.1} parent=55 // pred_check
          %p603 = pneg %p171
        $region74: #{tpu_custom_call.1} parent=55 // pred_check_branch
          %605 = sbr.rel (%p603) target = $region76
        $region75: #{tpu_custom_call.1} parent=55 // pred_region
          %607 = dma.done [#allocation10], 256
        $region76: #{tpu_custom_call.1} parent=55 // pred_fallthru
          _
        // Predicated region
        $region77: #{tpu_custom_call.1} parent=55 // pred_check
          %p608 = pneg %p192
        $region78: #{tpu_custom_call.1} parent=55 // pred_check_branch
          %610 = sbr.rel (%p608) target = $region80
        $region79: #{tpu_custom_call.1} parent=55 // pred_region
          %612 = dma.done [#allocation10], 256
        $region80: #{tpu_custom_call.1} parent=55 // pred_fallthru
          _
        // Predicated region
        $region81: #{tpu_custom_call.1} parent=55 // pred_check
          %p613 = pneg %p213
        $region82: #{tpu_custom_call.1} parent=55 // pred_check_branch
          %615 = sbr.rel (%p613) target = $region84
        $region83: #{tpu_custom_call.1} parent=55 // pred_region
          %617 = dma.done [#allocation13], 256
        $region84: #{tpu_custom_call.1} parent=55 // pred_fallthru
          _
        // Predicated region
        $region85: #{tpu_custom_call.1} parent=55 // pred_check
          %p618 = pneg %p234
        $region86: #{tpu_custom_call.1} parent=55 // pred_check_branch
          %620 = sbr.rel (%p618) target = $region88
        $region87: #{tpu_custom_call.1} parent=55 // pred_region
          %622 = dma.done [#allocation13], 256
        $region88: #{tpu_custom_call.1} parent=55 // pred_fallthru
          _
        // Predicated region
        $region89: #{tpu_custom_call.1} parent=55 // pred_check
          %p623 = pneg %p255
        $region90: #{tpu_custom_call.1} parent=55 // pred_check_branch
          %625 = sbr.rel (%p623) target = $region92
        $region91: #{tpu_custom_call.1} parent=55 // pred_region
          %627 = dma.done [#allocation16], 256
        $region92: #{tpu_custom_call.1} parent=55 // pred_fallthru
          _
        %s628 = sand.u32 %s41, 1
        %s629 = scalar_lea.sflag [#allocation3], %s628
        %s630 = sand.u32 %s65, 1
        %s631 = smul.addr %s630, 32
        %s632 = scalar_lea.vmem [#allocation2], %s631
        %p633 = pneg %p78
        %p634 = pneg %p75
        %p635 = pneg %p99
        %p636 = pneg %p96
        %s637 = sand.u32 %s41, 1
        %s638 = scalar_lea.sflag [#allocation3], %s637
        %s639 = sand.u32 %s116, 1
        %s640 = smul.addr %s639, 32
        %s641 = scalar_lea.vmem [#allocation7], %s640
        %p642 = pneg %p129
        %p643 = pneg %p126
        %p644 = pneg %p150
        %p645 = pneg %p147
        %p646 = pneg %p171
        %p647 = pneg %p168
        %p648 = pneg %p192
        %p649 = pneg %p189
        %p650 = pneg %p213
        %p651 = pneg %p210
        %p652 = pneg %p234
        %p653 = pneg %p231
        %p654 = pneg %p255
        %p655 = pneg %p252
        %p656 = pneg %p285
        %p657 = pneg %p282
        %s658 = sand.u32 %s272, 1
        %s659 = scalar_lea.sflag [#allocation4], %s658
        %s660 = sand.u32 %s272, 1
        %s661 = smul.addr %s660, 32
        %s662 = scalar_lea.vmem [#allocation17], %s661
        %p663 = pneg %p315
        %p664 = pneg %p312
        %s665 = sand.u32 %s41, 1
        %s666 = scalar_lea.sflag [#allocation19], %s665
        %s667 = sand.u32 %s302, 1
        %s668 = smul.addr %s667, 32
        %s669 = scalar_lea.vmem [#allocation18], %s668
        %p670 = pneg %p345
        %p671 = pneg %p342
        %s672 = sand.u32 %s41, 1
        %s673 = scalar_lea.sflag [#allocation19], %s672
        %s674 = sand.u32 %s332, 1
        %s675 = smul.addr %s674, 32
        %s676 = scalar_lea.vmem [#allocation20], %s675
        %p677 = pneg %p375
        %p678 = pneg %p372
        %s679 = sand.u32 %s41, 1
        %s680 = scalar_lea.sflag [#allocation22], %s679
        %s681 = sand.u32 %s362, 1
        %s682 = smul.addr %s681, 16
        %s683 = scalar_lea.vmem [#allocation21], %s682
        %p684 = pneg %p401
        %p685 = pneg %p398
        %s686 = sand.u32 %s41, 1
        %s687 = scalar_lea.sflag [#allocation22], %s686
        %s688 = sand.u32 %s388, 1
        %s689 = smul.addr %s688, 16
        %s690 = scalar_lea.vmem [#allocation23], %s689
        %s691 = smul.u32 %s45, 2
        %s692 = sadd.s32 %s691, %s46
        %s693 = smul.u32 %s45, 2
        %s694 = sadd.s32 %s693, %s46
        %s695 = smul.u32 %s45, 2
        %s696 = sadd.s32 %s695, %s46
        %s697 = smul.u32 %s45, 2
        %s698 = sadd.s32 %s697, %s46
        %s699 = smul.u32 %s45, 2
        %s700 = sadd.s32 %s699, %s46
        %s701 = smul.u32 %s45, 2
        %s702 = sadd.s32 %s701, %s46
        %p703 = scmp.eq.s32.totalorder %s46, 0
        // Predicated region
        $region93: #{tpu_custom_call.1} parent=55 // pred_check
          %p704 = pneg %p703
        $region94: #{tpu_custom_call.1} parent=55 // pred_check_branch
          %706 = sbr.rel (%p704) target = $region96
        $region95: #{tpu_custom_call.1} parent=55 // pred_region
          %vm707 = vcmask 130048
          %708 = vst.msk [vmem:[%s690] sm:$0xff] %vm707, 0.0
          %709 = vst.msk [vmem:[%s690 + $0x8] sm:$0xff] %vm707, 0.0
        $region96: #{tpu_custom_call.1} parent=55 // pred_fallthru
          _
        %v710 = vld [vmem:[#allocation5] sm:$0xff]
        %v711 = vld [vmem:[#allocation5 + $0x8] sm:$0xff]
        %v712 = vld [vmem:[%s577] sm:$0xff]
        %v713 = vld [vmem:[%s577 + $0x8] sm:$0xff]
        %v714 = vmul.f32 %v712, %v710
        %v715 = vmul.f32 %v713, %v711
        %v716 = vld [vmem:[%s592] sm:$0xff]
        %v717 = vld [vmem:[%s592 + $0x8] sm:$0xff]
        %v718 = vadd.f32 %v714, %v716
        %v719 = vadd.f32 %v715, %v717
        %s720 = scalar_lea.vmem %s577, 16 [#allocation2]
        %v721 = vld [vmem:[%s720] sm:$0xff]
        %v722 = vld [vmem:[%s720 + $0x8] sm:$0xff]
        %v723 = vmul.f32 %v721, %v710
        %v724 = vmul.f32 %v722, %v711
        %s725 = scalar_lea.vmem %s592, 16 [#allocation7]
        %v726 = vld [vmem:[%s725] sm:$0xff]
        %v727 = vld [vmem:[%s725 + $0x8] sm:$0xff]
        %v728 = vadd.f32 %v723, %v726
        %v729 = vadd.f32 %v724, %v727
        %vm730 = vcmask 130048
        %731 = vst.msk [vmem:[%s662] sm:$0xff] %vm730, %v718
        %732 = vst.msk [vmem:[%s662 + $0x8] sm:$0xff] %vm730, %v719
        %s733 = scalar_lea.vmem %s662, 16 [#allocation17]
        %734 = vst.msk [vmem:[%s733] sm:$0xff] %vm730, %v728
        %735 = vst.msk [vmem:[%s733 + $0x8] sm:$0xff] %vm730, %v729
        %v736 = vadd.f32 %v718, %v728
        %v737 = vadd.f32 %v719, %v729
        %v738 = vld [vmem:[#allocation8] sm:$0xff]
        %v739 = vld [vmem:[#allocation8 + $0x8] sm:$0xff]
        %v741 = vsel %vm730, %v738, 0
        %v744 = vsel %vm730, %v739, 0
        %746 = vmatpush.msra.mxu0 0.0
        %747 = vmatpush.msra.mxu0 0.0
        %748 = vmatpush.msra.mxu0 0.0
        %749 = vmatpush.msra.mxu0 0.0
        %750 = vmatpush.msra.mxu0 0.0
        %751 = vmatpush.msra.mxu0 0.0
        %752 = vmatpush.msra.mxu0 0.0
        %753 = vmatpush.msra.mxu0 0.0
        %754 = vmatpush.msra.mxu0 0.0
        %755 = vmatpush.msra.mxu0 0.0
        %756 = vmatpush.msra.mxu0 0.0
        %757 = vmatpush.msra.mxu0 0.0
        %758 = vmatpush.msra.mxu0 0.0
        %759 = vmatpush.msra.mxu0 0.0
        %760 = vmatpush.msra.mxu0 %v719
        %761 = vmatpush.msra.mxu0 %v718
        %762 = vmatmul.f32.gmra.mxu0 %v741
        %v763 = vpop.f32.mrf.mxu0
        %v764 = vadd.f32 0.0, %v763
        %765 = vmatmul.f32.gmra.mxu0 %v744
        %v766 = vpop.f32.mrf.mxu0
        %v767 = vadd.f32 0.0, %v766
        %768 = vdwg.mxu0
        %v769 = vld [vmem:[#allocation9] sm:$0xff]
        %v770 = vld [vmem:[#allocation9 + $0x8] sm:$0xff]
        %v772 = vsel %vm730, %v769, 0
        %v775 = vsel %vm730, %v770, 0
        %777 = vmatpush.msra.mxu0 0.0
        %778 = vmatpush.msra.mxu0 0.0
        %779 = vmatpush.msra.mxu0 0.0
        %780 = vmatpush.msra.mxu0 0.0
        %781 = vmatpush.msra.mxu0 0.0
        %782 = vmatpush.msra.mxu0 0.0
        %783 = vmatpush.msra.mxu0 0.0
        %784 = vmatpush.msra.mxu0 0.0
        %785 = vmatpush.msra.mxu0 0.0
        %786 = vmatpush.msra.mxu0 0.0
        %787 = vmatpush.msra.mxu0 0.0
        %788 = vmatpush.msra.mxu0 0.0
        %789 = vmatpush.msra.mxu0 0.0
        %790 = vmatpush.msra.mxu0 0.0
        %791 = vmatpush.msra.mxu0 %v729
        %792 = vmatpush.msra.mxu0 %v728
        %793 = vmatmul.f32.gmra.mxu0 %v772
        %v794 = vpop.f32.mrf.mxu0
        %v795 = vadd.f32 0.0, %v794
        %796 = vmatmul.f32.gmra.mxu0 %v775
        %v797 = vpop.f32.mrf.mxu0
        %v798 = vadd.f32 0.0, %v797
        %799 = vdwg.mxu0
        %v800 = vld [vmem:[#allocation11] sm:$0xff]
        %v801 = vld [vmem:[#allocation11 + $0x8] sm:$0xff]
        %v803 = vsel %vm730, %v800, 0
        %v806 = vsel %vm730, %v801, 0
        %808 = vmatpush.msra.mxu0 0.0
        %809 = vmatpush.msra.mxu0 0.0
        %810 = vmatpush.msra.mxu0 0.0
        %811 = vmatpush.msra.mxu0 0.0
        %812 = vmatpush.msra.mxu0 0.0
        %813 = vmatpush.msra.mxu0 0.0
        %814 = vmatpush.msra.mxu0 0.0
        %815 = vmatpush.msra.mxu0 0.0
        %816 = vmatpush.msra.mxu0 0.0
        %817 = vmatpush.msra.mxu0 0.0
        %818 = vmatpush.msra.mxu0 0.0
        %819 = vmatpush.msra.mxu0 0.0
        %820 = vmatpush.msra.mxu0 0.0
        %821 = vmatpush.msra.mxu0 0.0
        %822 = vmatpush.msra.mxu0 %v737
        %823 = vmatpush.msra.mxu0 %v736
        %824 = vmatmul.f32.gmra.mxu0 %v803
        %v825 = vpop.f32.mrf.mxu0
        %v826 = vadd.f32 0.0, %v825
        %827 = vmatmul.f32.gmra.mxu0 %v806
        %v828 = vpop.f32.mrf.mxu0
        %v829 = vadd.f32 0.0, %v828
        %830 = vdwg.mxu0
        %v831 = vsub.f32 %v764, %v795
        %v832 = vsub.f32 %v767, %v798
        %833 = vst.msk [vmem:[%s669] sm:$0xff] %vm730, %v831
        %834 = vst.msk [vmem:[%s669 + $0x8] sm:$0xff] %vm730, %v832
        %v835 = vsub.f32 %v826, %v764
        %v836 = vsub.f32 %v829, %v767
        %v837 = vsub.f32 %v835, %v795
        %v838 = vsub.f32 %v836, %v798
        %s839 = scalar_lea.vmem %s669, 16 [#allocation18]
        %840 = vst.msk [vmem:[%s839] sm:$0xff] %vm730, %v837
        %841 = vst.msk [vmem:[%s839 + $0x8] sm:$0xff] %vm730, %v838
        %v842 = vld [vmem:[#allocation12] sm:$0xff]
        %v843 = vld [vmem:[#allocation12 + $0x8] sm:$0xff]
        %v845 = vsel %vm730, %v718, 0
        %v848 = vsel %vm730, %v719, 0
        %850 = vmatpush.msra.mxu0 0.0
        %851 = vmatpush.msra.mxu0 0.0
        %852 = vmatpush.msra.mxu0 0.0
        %853 = vmatpush.msra.mxu0 0.0
        %854 = vmatpush.msra.mxu0 0.0
        %855 = vmatpush.msra.mxu0 0.0
        %856 = vmatpush.msra.mxu0 0.0
        %857 = vmatpush.msra.mxu0 0.0
        %858 = vmatpush.msra.mxu0 0.0
        %859 = vmatpush.msra.mxu0 0.0
        %860 = vmatpush.msra.mxu0 0.0
        %861 = vmatpush.msra.mxu0 0.0
        %862 = vmatpush.msra.mxu0 0.0
        %863 = vmatpush.msra.mxu0 0.0
        %864 = vmatpush.msra.mxu0 %v843
        %865 = vmatpush.msra.mxu0 %v842
        %866 = vmatmul.f32.gmra.mxu0 %v845
        %v867 = vpop.f32.mrf.mxu0
        %v868 = vadd.f32 0.0, %v867
        %869 = vmatmul.f32.gmra.mxu0 %v848
        %v870 = vpop.f32.mrf.mxu0
        %v871 = vadd.f32 0.0, %v870
        %872 = vdwg.mxu0
        %v873 = vld [vmem:[#allocation14] sm:$0xff]
        %v874 = vld [vmem:[#allocation14 + $0x8] sm:$0xff]
        %v876 = vsel %vm730, %v728, 0
        %v879 = vsel %vm730, %v729, 0
        %881 = vmatpush.msra.mxu0 0.0
        %882 = vmatpush.msra.mxu0 0.0
        %883 = vmatpush.msra.mxu0 0.0
        %884 = vmatpush.msra.mxu0 0.0
        %885 = vmatpush.msra.mxu0 0.0
        %886 = vmatpush.msra.mxu0 0.0
        %887 = vmatpush.msra.mxu0 0.0
        %888 = vmatpush.msra.mxu0 0.0
        %889 = vmatpush.msra.mxu0 0.0
        %890 = vmatpush.msra.mxu0 0.0
        %891 = vmatpush.msra.mxu0 0.0
        %892 = vmatpush.msra.mxu0 0.0
        %893 = vmatpush.msra.mxu0 0.0
        %894 = vmatpush.msra.mxu0 0.0
        %895 = vmatpush.msra.mxu0 %v874
        %896 = vmatpush.msra.mxu0 %v873
        %897 = vmatmul.f32.gmra.mxu0 %v876
        %v898 = vpop.f32.mrf.mxu0
        %v899 = vadd.f32 0.0, %v898
        %900 = vmatmul.f32.gmra.mxu0 %v879
        %v901 = vpop.f32.mrf.mxu0
        %v902 = vadd.f32 0.0, %v901
        %903 = vdwg.mxu0
        %v904 = vld [vmem:[#allocation15] sm:$0xff]
        %v905 = vld [vmem:[#allocation15 + $0x8] sm:$0xff]
        %v907 = vsel %vm730, %v736, 0
        %v910 = vsel %vm730, %v737, 0
        %912 = vmatpush.msra.mxu0 0.0
        %913 = vmatpush.msra.mxu0 0.0
        %914 = vmatpush.msra.mxu0 0.0
        %915 = vmatpush.msra.mxu0 0.0
        %916 = vmatpush.msra.mxu0 0.0
        %917 = vmatpush.msra.mxu0 0.0
        %918 = vmatpush.msra.mxu0 0.0
        %919 = vmatpush.msra.mxu0 0.0
        %920 = vmatpush.msra.mxu0 0.0
        %921 = vmatpush.msra.mxu0 0.0
        %922 = vmatpush.msra.mxu0 0.0
        %923 = vmatpush.msra.mxu0 0.0
        %924 = vmatpush.msra.mxu0 0.0
        %925 = vmatpush.msra.mxu0 0.0
        %926 = vmatpush.msra.mxu0 %v905
        %927 = vmatpush.msra.mxu0 %v904
        %928 = vmatmul.f32.gmra.mxu0 %v907
        %v929 = vpop.f32.mrf.mxu0
        %v930 = vadd.f32 0.0, %v929
        %931 = vmatmul.f32.gmra.mxu0 %v910
        %v932 = vpop.f32.mrf.mxu0
        %v933 = vadd.f32 0.0, %v932
        %934 = vdwg.mxu0
        %v935 = vsub.f32 %v868, %v899
        %v936 = vsub.f32 %v871, %v902
        %v937 = vsub.f32 %v930, %v868
        %v938 = vsub.f32 %v933, %v871
        %v939 = vsub.f32 %v937, %v899
        %v940 = vsub.f32 %v938, %v902
        %941 = vst.msk [vmem:[%s676] sm:$0xff] %vm730, %v935
        %942 = vst.msk [vmem:[%s676 + $0x8] sm:$0xff] %vm730, %v936
        %s943 = scalar_lea.vmem %s676, 16 [#allocation20]
        %944 = vst.msk [vmem:[%s943] sm:$0xff] %vm730, %v939
        %945 = vst.msk [vmem:[%s943 + $0x8] sm:$0xff] %vm730, %v940
        %v946 = vmul.f32 %v935, %v935
        %v947 = vmul.f32 %v936, %v936
        %v948 = vmul.f32 %v939, %v939
        %v949 = vmul.f32 %v940, %v940
        %v950 = vadd.f32 %v946, %v948
        %v951 = vadd.f32 %v947, %v949
        %v952 = vrsqrt.pop %v950
        %v953 = vmul.f32 %v952, %v950
        %v954 = vmul.f32 %v953, %v952
        %v955 = vmul.f32 0.5, %v954
        %v956 = vsub.f32 1.5, %v955
        %v957 = vmul.f32 %v952, %v956
        %v958 = vmul.f32 %v950, %v957
        %vm959 = vcmp.eq.f32.partialorder %v950, inf
        %v960 = vsel %vm959, %v950, %v958
        %vm961 = vcmp.eq.f32.partialorder %v950, 0.0
        %v962 = vand.u32 %v950, 2147483648
        %v963 = vsel %vm961, %v962, %v960
        %v964 = vrsqrt.pop %v951
        %v965 = vmul.f32 %v964, %v951
        %v966 = vmul.f32 %v965, %v964
        %v967 = vmul.f32 0.5, %v966
        %v968 = vsub.f32 1.5, %v967
        %v969 = vmul.f32 %v964, %v968
        %v970 = vmul.f32 %v951, %v969
        %vm971 = vcmp.eq.f32.partialorder %v951, inf
        %v972 = vsel %vm971, %v951, %v970
        %vm973 = vcmp.eq.f32.partialorder %v951, 0.0
        %v974 = vand.u32 %v951, 2147483648
        %v975 = vsel %vm973, %v974, %v972
        %976 = vst.msk [vmem:[%s683] sm:$0xff] %vm730, %v963
        %977 = vst.msk [vmem:[%s683 + $0x8] sm:$0xff] %vm730, %v975
        %v978 = vld [vmem:[%s690] sm:$0xff]
        %v979 = vld [vmem:[%s690 + $0x8] sm:$0xff]
        %v980 = vadd.f32 %v978, %v950
        %v981 = vadd.f32 %v979, %v951
        %982 = vst.msk [vmem:[%s690] sm:$0xff] %vm730, %v980
        %983 = vst.msk [vmem:[%s690 + $0x8] sm:$0xff] %vm730, %v981
        %s984 = sand.u32 %s272, 1
        %s985 = scalar_lea.sflag [#allocation4], %s984
        %s986 = sand.u32 %s272, 1
        %s987 = smul.addr %s986, 32
        %s988 = scalar_lea.vmem [#allocation17], %s987
        %s989 = sand.u32 %s41, 1
        %s990 = scalar_lea.sflag [#allocation19], %s989
        %s991 = sand.u32 %s302, 1
        %s992 = smul.addr %s991, 32
        %s993 = scalar_lea.vmem [#allocation18], %s992
        %s994 = sand.u32 %s41, 1
        %s995 = scalar_lea.sflag [#allocation19], %s994
        %s996 = sand.u32 %s332, 1
        %s997 = smul.addr %s996, 32
        %s998 = scalar_lea.vmem [#allocation20], %s997
        %s999 = sand.u32 %s41, 1
        %s1000 = scalar_lea.sflag [#allocation22], %s999
        %s1001 = sand.u32 %s362, 1
        %s1002 = smul.addr %s1001, 16
        %s1003 = scalar_lea.vmem [#allocation21], %s1002
        %s1004 = sand.u32 %s41, 1
        %s1005 = scalar_lea.sflag [#allocation22], %s1004
        %s1006 = sand.u32 %s388, 1
        %s1007 = smul.addr %s1006, 16
        %s1008 = scalar_lea.vmem [#allocation23], %s1007
        // Predicated region
        $region97: #{tpu_custom_call.1} parent=55 // pred_check
          %p1009 = pneg %p282
        $region98: #{tpu_custom_call.1} parent=55 // pred_check_branch
          %1011 = sbr.rel (%p1009) target = $region100
        $region99: #{tpu_custom_call.1} parent=55 // pred_region
          %s1012 = smul.u32 %s45, 2
          %s1013 = sadd.s32 %s1012, %s46
          %1015 = vsyncadd %s985, 0
          %s1016 = smul.addr %s1013, 4
          %s1017 = smul.addr %s1016, 8
          %s1018 = scalar_lea.hbm %s9, %s1017
          %s1019 = sshll.u32 %s988, 4
          %s1020 = int_to_ptr.vmem [resolvable:$true] %s1019
          %s1021 = sshll.u32 %s1018, 4
          %s1022 = int_to_ptr.hbm [resolvable:$true] %s1021
          %1027 = dma.vmem_to_hbm [thread:$0]  %s1020, 512, %s1022, %s985, 128, 128, 8
        $region100: #{tpu_custom_call.1} parent=55 // pred_fallthru
          _
        // Predicated region
        $region101: #{tpu_custom_call.1} parent=55 // pred_check
          %p1028 = pneg %p312
        $region102: #{tpu_custom_call.1} parent=55 // pred_check_branch
          %1030 = sbr.rel (%p1028) target = $region104
        $region103: #{tpu_custom_call.1} parent=55 // pred_region
          %s1031 = smul.u32 %s45, 2
          %s1032 = sadd.s32 %s1031, %s46
          %1034 = vsyncadd %s990, 0
          %s1035 = smul.addr %s1032, 4
          %s1036 = smul.addr %s1035, 8
          %s1037 = scalar_lea.hbm %s10, %s1036
          %s1038 = sshll.u32 %s993, 4
          %s1039 = int_to_ptr.vmem [resolvable:$true] %s1038
          %s1040 = sshll.u32 %s1037, 4
          %s1041 = int_to_ptr.hbm [resolvable:$true] %s1040
          %1046 = dma.vmem_to_hbm [thread:$0]  %s1039, 512, %s1041, %s990, 128, 128, 8
        $region104: #{tpu_custom_call.1} parent=55 // pred_fallthru
          _
        // Predicated region
        $region105: #{tpu_custom_call.1} parent=55 // pred_check
          %p1047 = pneg %p342
        $region106: #{tpu_custom_call.1} parent=55 // pred_check_branch
          %1049 = sbr.rel (%p1047) target = $region108
        $region107: #{tpu_custom_call.1} parent=55 // pred_region
          %s1050 = smul.u32 %s45, 2
          %s1051 = sadd.s32 %s1050, %s46
          %1053 = vsyncadd %s995, 0
          %s1054 = smul.addr %s1051, 4
          %s1055 = smul.addr %s1054, 8
          %s1056 = scalar_lea.hbm %s11, %s1055
          %s1057 = sshll.u32 %s998, 4
          %s1058 = int_to_ptr.vmem [resolvable:$true] %s1057
          %s1059 = sshll.u32 %s1056, 4
          %s1060 = int_to_ptr.hbm [resolvable:$true] %s1059
          %1065 = dma.vmem_to_hbm [thread:$0]  %s1058, 512, %s1060, %s995, 128, 128, 8
        $region108: #{tpu_custom_call.1} parent=55 // pred_fallthru
          _
        // Predicated region
        $region109: #{tpu_custom_call.1} parent=55 // pred_check
          %p1066 = pneg %p372
        $region110: #{tpu_custom_call.1} parent=55 // pred_check_branch
          %1068 = sbr.rel (%p1066) target = $region112
        $region111: #{tpu_custom_call.1} parent=55 // pred_region
          %s1069 = smul.u32 %s45, 2
          %s1070 = sadd.s32 %s1069, %s46
          %1072 = vsyncadd %s1000, 0
          %s1073 = smul.addr %s1070, 2
          %s1074 = smul.addr %s1073, 8
          %s1075 = scalar_lea.hbm %s12, %s1074
          %s1076 = sshll.u32 %s1003, 4
          %s1077 = int_to_ptr.vmem [resolvable:$true] %s1076
          %s1078 = sshll.u32 %s1075, 4
          %s1079 = int_to_ptr.hbm [resolvable:$true] %s1078
          %1084 = dma.vmem_to_hbm [thread:$0]  %s1077, 256, %s1079, %s1000, 128, 128, 8
        $region112: #{tpu_custom_call.1} parent=55 // pred_fallthru
          _
        // Predicated region
        $region113: #{tpu_custom_call.1} parent=55 // pred_check
          %p1085 = pneg %p398
        $region114: #{tpu_custom_call.1} parent=55 // pred_check_branch
          %1087 = sbr.rel (%p1085) target = $region116
        $region115: #{tpu_custom_call.1} parent=55 // pred_region
          %1089 = vsyncadd %s1005, 0
          %s1090 = smul.addr %s45, 2
          %s1091 = smul.addr %s1090, 8
          %s1092 = scalar_lea.hbm %s13, %s1091
          %s1093 = sshll.u32 %s1008, 4
          %s1094 = int_to_ptr.vmem [resolvable:$true] %s1093
          %s1095 = sshll.u32 %s1092, 4
          %s1096 = int_to_ptr.hbm [resolvable:$true] %s1095
          %1101 = dma.vmem_to_hbm [thread:$0]  %s1094, 256, %s1096, %s1005, 128, 128, 8
        $region116: #{tpu_custom_call.1} parent=55 // pred_fallthru
          _
      $region56: #{tpu_custom_call.1} parent=5 // pred_fallthru
        _
      %p1102 = scmp.le.s32.totalorder 2, %s36
      // Predicated region
      $region117: #{tpu_custom_call.1} parent=5 // pred_check
        %p1103 = pneg %p1102
      $region118: #{tpu_custom_call.1} parent=5 // pred_check_branch
        %1105 = sbr.rel (%p1103) target = $region120
      $region119: #{tpu_custom_call.1} parent=5 // pred_region
        %s1106 = ssub.s32 %s36, 2
        // Predicated region
        $region121: #{tpu_custom_call.1} parent=119 // pred_check
          %p1107 = pneg %p288
        $region122: #{tpu_custom_call.1} parent=119 // pred_check_branch
          %1109 = sbr.rel (%p1107) target = $region124
        $region123: #{tpu_custom_call.1} parent=119 // pred_region
          %s1110 = sand.u32 %s273, 1
          %s1111 = scalar_lea.sflag [#allocation4], %s1110
          %s1112 = sand.u32 %s273, 1
          %s1113 = smul.addr %s1112, 32
          %s1114 = scalar_lea.vmem [#allocation17], %s1113
          %1116 = dma.done %s1111, 512
        $region124: #{tpu_custom_call.1} parent=119 // pred_fallthru
          _
        // Predicated region
        $region125: #{tpu_custom_call.1} parent=119 // pred_check
          %p1117 = pneg %p318
        $region126: #{tpu_custom_call.1} parent=119 // pred_check_branch
          %1119 = sbr.rel (%p1117) target = $region128
        $region127: #{tpu_custom_call.1} parent=119 // pred_region
          %s1120 = sand.u32 %s42, 1
          %s1121 = scalar_lea.sflag [#allocation19], %s1120
          %s1122 = sand.u32 %s303, 1
          %s1123 = smul.addr %s1122, 32
          %s1124 = scalar_lea.vmem [#allocation18], %s1123
          %1126 = dma.done %s1121, 512
        $region128: #{tpu_custom_call.1} parent=119 // pred_fallthru
          _
        // Predicated region
        $region129: #{tpu_custom_call.1} parent=119 // pred_check
          %p1127 = pneg %p348
        $region130: #{tpu_custom_call.1} parent=119 // pred_check_branch
          %1129 = sbr.rel (%p1127) target = $region132
        $region131: #{tpu_custom_call.1} parent=119 // pred_region
          %s1130 = sand.u32 %s42, 1
          %s1131 = scalar_lea.sflag [#allocation19], %s1130
          %s1132 = sand.u32 %s333, 1
          %s1133 = smul.addr %s1132, 32
          %s1134 = scalar_lea.vmem [#allocation20], %s1133
          %1136 = dma.done %s1131, 512
        $region132: #{tpu_custom_call.1} parent=119 // pred_fallthru
          _
        // Predicated region
        $region133: #{tpu_custom_call.1} parent=119 // pred_check
          %p1137 = pneg %p378
        $region134: #{tpu_custom_call.1} parent=119 // pred_check_branch
          %1139 = sbr.rel (%p1137) target = $region136
        $region135: #{tpu_custom_call.1} parent=119 // pred_region
          %s1140 = sand.u32 %s42, 1
          %s1141 = scalar_lea.sflag [#allocation22], %s1140
          %s1142 = sand.u32 %s363, 1
          %s1143 = smul.addr %s1142, 16
          %s1144 = scalar_lea.vmem [#allocation21], %s1143
          %1146 = dma.done %s1141, 256
        $region136: #{tpu_custom_call.1} parent=119 // pred_fallthru
          _
        // Predicated region
        $region137: #{tpu_custom_call.1} parent=119 // pred_check
          %p1147 = pneg %p404
        $region138: #{tpu_custom_call.1} parent=119 // pred_check_branch
          %1149 = sbr.rel (%p1147) target = $region140
        $region139: #{tpu_custom_call.1} parent=119 // pred_region
          %s1150 = sand.u32 %s42, 1
          %s1151 = scalar_lea.sflag [#allocation22], %s1150
          %s1152 = sand.u32 %s389, 1
          %s1153 = smul.addr %s1152, 16
          %s1154 = scalar_lea.vmem [#allocation23], %s1153
          %1156 = dma.done %s1151, 256
        $region140: #{tpu_custom_call.1} parent=119 // pred_fallthru
          _
      $region120: #{tpu_custom_call.1} parent=5 // pred_fallthru
        _
    $region6: #{tpu_custom_call.1} parent=1 // loop_footer
      %s40 = sadd.s32 1, %s36
    $region7: #{tpu_custom_call.1} parent=1 // loop_footer_branch
      %35 = sbr.rel target = $region3
    $region8: #{tpu_custom_call.1} parent=1 // loop_exit
      _
    %1157 = vsyncpa [#allocation3], 1
    %s1158 = scalar_lea.sflag [#allocation3], 1
    %1159 = vsyncpa %s1158, 1
    %1160 = vsyncpa [#allocation6], 1
    %1161 = vsyncpa [#allocation10], 1
    %1162 = vsyncpa [#allocation13], 1
    %1163 = vsyncpa [#allocation16], 1
    %1164 = vsyncpa [#allocation4], 1
    %s1165 = scalar_lea.sflag [#allocation4], 1
    %1166 = vsyncpa %s1165, 1
    %1167 = vsyncpa [#allocation19], 1
    %s1168 = scalar_lea.sflag [#allocation19], 1
    %1169 = vsyncpa %s1168, 1
    %1170 = vsyncpa [#allocation22], 1
    %s1171 = scalar_lea.sflag [#allocation22], 1
    %1172 = vsyncpa %s1171, 1

</llo_original>
